<compile_context>
chip_gen: v7x
topology: tpu7x:2x2x1
jax: 0.10.0
libtpu: 0.0.40
codegen_flags: <defaults>
</compile_context>

<pallas_src>
import numpy as np
import jax
import jax.numpy as jnp
from jax.experimental import pallas as pl
from jax.experimental.pallas import tpu as pltpu


# -----------------------------------------------------------------------------
# Network configuration (mirrors DINONetwork.__init__)
# -----------------------------------------------------------------------------
D_IN = 3
D_OUT = 8
D_HIDDEN = 32
N_LAYERS = 4                 # number of hidden layers
SKIP_IN = (2,)               # layer indices that get the skip concat
OUTPUT_BIAS = 0.5
OUTPUT_SCALE = 2.0
WEIGHT_NORM = True


def build_layer_dims():
    """Reproduce the dims / out_dim bookkeeping from DINONetwork.__init__."""
    dims = [D_IN] + [D_HIDDEN] * N_LAYERS + [D_OUT]
    num_layers = len(dims)
    for l in range(num_layers - 1):
        if l in SKIP_IN:
            dims[l] += dims[0]
    layer_shapes = []  # (in_dim, out_dim) per linear, PyTorch convention
    for l in range(num_layers - 1):
        if (l + 1) in SKIP_IN:
            out_dim = dims[l + 1] - dims[0]
        else:
            out_dim = dims[l + 1]
        layer_shapes.append((dims[l], out_dim))
    return dims, layer_shapes


def init_params(key):
    """Deterministic weight-normalized Linear params, PyTorch (out, in) layout.

    nn.utils.weight_norm(Linear) with dim=0 reparametrizes
        weight = g * v / ||v||_row   (row norm over the input dim)
    We materialize v, g and fold them into an effective weight (host glue).
    """
    _, layer_shapes = build_layer_dims()
    params = []
    for (d_i, d_o) in layer_shapes:
        key, k_v, k_g, k_b = jax.random.split(key, 4)
        bound = 1.0 / np.sqrt(d_i)
        v = jax.random.uniform(k_v, (d_o, d_i), jnp.float32, -bound, bound)
        if WEIGHT_NORM:
            g = jax.random.uniform(k_g, (d_o, 1), jnp.float32, 0.5, 1.5)
            w = g * v / jnp.linalg.norm(v, axis=1, keepdims=True)
        else:
            w = v
        b = jax.random.uniform(k_b, (d_o,), jnp.float32, -bound, bound)
        params.append((w, b))   # (out, in), (out,)
    return params


def prep_kernel_params(params, weight_dtype=jnp.bfloat16):
    """Host-side folding: split skip layer, fold 1/sqrt(2) and output affine.

    Returns the 11 arrays the kernel consumes, in kernel argument order:
      w0, b0, w1, b1, w2a, w2b, b2, w3, b3, w4, b4
    Weights (out, in) in `weight_dtype`; biases (out, 1) in f32.
    """
    (w0, b0), (w1, b1), (w2, b2), (w3, b3), (w4, b4) = params
    inv_sqrt2 = np.float32(1.0 / np.sqrt(2.0))
    # Skip layer l=2: cat([x, x_in]) / sqrt(2) @ W2.T
    #   == x @ (W2[:, :32]/sqrt2).T + x_in @ (W2[:, 32:]/sqrt2).T
    w2a = w2[:, :D_HIDDEN] * inv_sqrt2      # multiplies the running activation
    w2b = w2[:, D_HIDDEN:] * inv_sqrt2      # multiplies the skip input x_in
    # Output affine folded into the last linear:
    #   scale * (x @ W4.T + b4 + bias) == x @ (scale*W4).T + scale*(b4 + bias)
    w4f = np.float32(OUTPUT_SCALE) * w4
    b4f = np.float32(OUTPUT_SCALE) * (b4 + np.float32(OUTPUT_BIAS))

    def W(w):
        return jnp.asarray(w, weight_dtype)

    def B(b):
        return jnp.asarray(b, jnp.float32).reshape(-1, 1)

    return (W(w0), B(b0), W(w1), B(b1), W(w2a), W(w2b), B(b2),
            W(w3), B(b3), W(w4f), B(b4f))


# -----------------------------------------------------------------------------
# Pallas kernel: fused MLP forward, feature-major (D, N) activations
# -----------------------------------------------------------------------------
def mlp_kernel(x_ref, w0, b0, w1, b1, w2a, w2b, b2, w3, b3, w4, b4, o_ref):
    """One batch tile: x_ref (D_IN, TN) f32 -> o_ref (D_OUT, TN) f32."""
    x_in = x_ref[...]                                   # (3, TN) f32
    xb_in = x_in.astype(jnp.bfloat16)                   # bf16 MXU operand

    def dense(w_ref, xb, b_ref):
        # bf16 x bf16 -> f32 accumulate; bias add stays f32 on the VPU.
        return jnp.dot(w_ref[...], xb,
                       preferred_element_type=jnp.float32) + b_ref[...]

    h = jnp.maximum(dense(w0, xb_in, b0), 0.0)                       # l=0: 3->32
    h = jnp.maximum(dense(w1, h.astype(jnp.bfloat16), b1), 0.0)      # l=1: 32->32
    # l=2: skip layer; concat replaced by a split matmul (1/sqrt2 pre-folded).
    h = (jnp.dot(w2a[...], h.astype(jnp.bfloat16),
                 preferred_element_type=jnp.float32)
         + jnp.dot(w2b[...], xb_in, preferred_element_type=jnp.float32)
         + b2[...])
    h = jnp.maximum(h, 0.0)
    h = jnp.maximum(dense(w3, h.astype(jnp.bfloat16), b3), 0.0)      # l=3: 32->32
    # l=4: output layer; output_scale/output_bias already folded into w4/b4.
    o_ref[...] = dense(w4, h.astype(jnp.bfloat16), b4).astype(o_ref.dtype)


def dino_forward(points, kparams, *, tile_n=512):
    """points: (N, D_IN) f32 (module convention). Returns (N, D_OUT) f32."""
    N, d_in = points.shape
    assert d_in == D_IN
    n_tiles = pl.cdiv(N, tile_n)
    n_pad = n_tiles * tile_n

    # Feature-major (D, N): layout plumbing so the batch rides the lane axis.
    x = points.T
    if n_pad != N:
        x = jnp.pad(x, ((0, 0), (0, n_pad - N)))

    in_specs = [pl.BlockSpec((D_IN, tile_n), lambda i: (0, i))]
    # Weights/biases: full-array blocks with constant index maps -> resident.
    in_specs += [pl.BlockSpec(p.shape, lambda i: (0, 0)) for p in kparams]
    out_specs = pl.BlockSpec((D_OUT, tile_n), lambda i: (0, i))

    out = pl.pallas_call(
        mlp_kernel,
        out_shape=jax.ShapeDtypeStruct((D_OUT, n_pad), jnp.float32),
        grid_spec=pltpu.PrefetchScalarGridSpec(
            num_scalar_prefetch=0,
            grid=(n_tiles,),
            in_specs=in_specs,
            out_specs=out_specs,
        ),
        compiler_params=pltpu.CompilerParams(
            dimension_semantics=("parallel",),   # v7x: shard tiles over 2 TCs
        ),
    )(x, *kparams)
    return out[:, :N].T


# -----------------------------------------------------------------------------
# Pure-JAX references
# -----------------------------------------------------------------------------
def dino_forward_ref(points, params):
    """Exact mirror of the PyTorch forward (f32 everywhere)."""
    x_in = points
    x = x_in
    num_linear = len(params)
    for l, (w, b) in enumerate(params):
        if l in SKIP_IN:
            x = jnp.concatenate([x, x_in], axis=-1) / np.sqrt(2.0)
        x = x @ w.T + b
        if l < num_linear - 1:
            x = jnp.maximum(x, 0.0)
    return OUTPUT_SCALE * (x + OUTPUT_BIAS)


def dino_forward_ref_matched(points, kparams):
    """Same math / precision choices as the kernel (bf16 MXU, f32 accumulate)."""
    (w0, b0, w1, b1, w2a, w2b, b2, w3, b3, w4, b4) = kparams
    x_in = points.T.astype(jnp.float32)
    xb_in = x_in.astype(jnp.bfloat16)

    def dense(w, xb, b):
        return jnp.dot(w, xb, preferred_element_type=jnp.float32) + b

    h = jnp.maximum(dense(w0, xb_in, b0), 0.0)
    h = jnp.maximum(dense(w1, h.astype(jnp.bfloat16), b1), 0.0)
    h = (jnp.dot(w2a, h.astype(jnp.bfloat16), preferred_element_type=jnp.float32)
         + jnp.dot(w2b, xb_in, preferred_element_type=jnp.float32) + b2)
    h = jnp.maximum(h, 0.0)
    h = jnp.maximum(dense(w3, h.astype(jnp.bfloat16), b3), 0.0)
    y = dense(w4, h.astype(jnp.bfloat16), b4)
    return y.T


if __name__ == "__main__":
    key = jax.random.PRNGKey(0)
    k_pts, k_params = jax.random.split(key)

    N = 2048   # 4 batch tiles of 512 (even tile count -> both v7x TCs busy)
    points = jax.random.normal(k_pts, (N, D_IN), dtype=jnp.float32)
    params = init_params(k_params)
    kparams = prep_kernel_params(params)

    out = dino_forward(points, kparams, tile_n=512)
    out = jax.block_until_ready(out)
    assert out.shape == (N, D_OUT)

    # (1) tight check vs. a reference using the same bf16-operand math
    ref_matched = dino_forward_ref_matched(points, kparams)
    np.testing.assert_allclose(np.asarray(out), np.asarray(ref_matched),
                               rtol=2e-3, atol=2e-3)

    # (2) semantic check vs. the original f32 module math (tolerance covers
    #     the deliberate bf16 MXU-operand precision choice)
    ref_f32 = dino_forward_ref(points, params)
    np.testing.assert_allclose(np.asarray(out), np.asarray(ref_f32),
                               rtol=5e-2, atol=2e-1)

    print("KERNEL_OK")
</pallas_src>

<mosaic_0001>
module attributes {stable_mosaic.version = 11 : i64} {
  func.func @mlp_kernel(%arg0: i32, %arg1: memref<3x512xf32, #tpu.memory_space<vmem>>, %arg2: memref<32x3xbf16, #tpu.memory_space<vmem>>, %arg3: memref<32x1xf32, #tpu.memory_space<vmem>>, %arg4: memref<32x32xbf16, #tpu.memory_space<vmem>>, %arg5: memref<32x1xf32, #tpu.memory_space<vmem>>, %arg6: memref<32x32xbf16, #tpu.memory_space<vmem>>, %arg7: memref<32x3xbf16, #tpu.memory_space<vmem>>, %arg8: memref<32x1xf32, #tpu.memory_space<vmem>>, %arg9: memref<32x32xbf16, #tpu.memory_space<vmem>>, %arg10: memref<32x1xf32, #tpu.memory_space<vmem>>, %arg11: memref<8x32xbf16, #tpu.memory_space<vmem>>, %arg12: memref<8x1xf32, #tpu.memory_space<vmem>>, %arg13: memref<8x512xf32, #tpu.memory_space<vmem>>) attributes {dimension_semantics = [#tpu.dimension_semantics<parallel>], iteration_bounds = array<i64: 4>, scalar_prefetch = 0 : i64, scratch_operands = 0 : i64, tpu.core_type = #tpu.core_type<tc>, window_params = [{transform_indices = @transform_0, window_bounds = array<i64: 3, 512>}, {pipeline_mode = #tpu.pipeline_mode<synchronous>, transform_indices = @transform_1, window_bounds = array<i64: 32, 3>}, {pipeline_mode = #tpu.pipeline_mode<synchronous>, transform_indices = @transform_2, window_bounds = array<i64: 32, 1>}, {pipeline_mode = #tpu.pipeline_mode<synchronous>, transform_indices = @transform_3, window_bounds = array<i64: 32, 32>}, {pipeline_mode = #tpu.pipeline_mode<synchronous>, transform_indices = @transform_4, window_bounds = array<i64: 32, 1>}, {pipeline_mode = #tpu.pipeline_mode<synchronous>, transform_indices = @transform_5, window_bounds = array<i64: 32, 32>}, {pipeline_mode = #tpu.pipeline_mode<synchronous>, transform_indices = @transform_6, window_bounds = array<i64: 32, 3>}, {pipeline_mode = #tpu.pipeline_mode<synchronous>, transform_indices = @transform_7, window_bounds = array<i64: 32, 1>}, {pipeline_mode = #tpu.pipeline_mode<synchronous>, transform_indices = @transform_8, window_bounds = array<i64: 32, 32>}, {pipeline_mode = #tpu.pipeline_mode<synchronous>, transform_indices = @transform_9, window_bounds = array<i64: 32, 1>}, {pipeline_mode = #tpu.pipeline_mode<synchronous>, transform_indices = @transform_10, window_bounds = array<i64: 8, 32>}, {pipeline_mode = #tpu.pipeline_mode<synchronous>, transform_indices = @transform_11, window_bounds = array<i64: 8, 1>}, {transform_indices = @transform_12, window_bounds = array<i64: 8, 512>}]} {
    %c0 = arith.constant 0 : index
    %c0_0 = arith.constant 0 : index
    %0 = vector.load %arg1[%c0, %c0_0] : memref<3x512xf32, #tpu.memory_space<vmem>>, vector<3x512xf32>
    %1 = arith.truncf %0 : vector<3x512xf32> to vector<3x512xbf16>
    %c0_1 = arith.constant 0 : index
    %c0_2 = arith.constant 0 : index
    %2 = vector.load %arg2[%c0_1, %c0_2] : memref<32x3xbf16, #tpu.memory_space<vmem>>, vector<32x3xbf16>
    %cst = arith.constant dense<0.000000e+00> : vector<32x512xf32>
    %3 = tpu.matmul %2, %1, %cst {dimension_numbers = #tpu.dot_dimension_numbers<[1], [0], [0], [1], [0, 0, 1, 1], [], []>} : vector<32x3xbf16>, vector<3x512xbf16>, vector<32x512xf32> -> vector<32x512xf32>
    %c0_3 = arith.constant 0 : index
    %c0_4 = arith.constant 0 : index
    %4 = vector.load %arg3[%c0_3, %c0_4] : memref<32x1xf32, #tpu.memory_space<vmem>>, vector<32x1xf32>
    %5 = vector.broadcast %4 : vector<32x1xf32> to vector<32x512xf32>
    %6 = arith.addf %3, %5 : vector<32x512xf32>
    %cst_5 = arith.constant 0.000000e+00 : f32
    %7 = vector.broadcast %cst_5 : f32 to vector<32x512xf32>
    %8 = arith.maximumf %6, %7 : vector<32x512xf32>
    %9 = arith.truncf %8 : vector<32x512xf32> to vector<32x512xbf16>
    %c0_6 = arith.constant 0 : index
    %c0_7 = arith.constant 0 : index
    %10 = vector.load %arg4[%c0_6, %c0_7] : memref<32x32xbf16, #tpu.memory_space<vmem>>, vector<32x32xbf16>
    %cst_8 = arith.constant dense<0.000000e+00> : vector<32x512xf32>
    %11 = tpu.matmul %10, %9, %cst_8 {dimension_numbers = #tpu.dot_dimension_numbers<[1], [0], [0], [1], [0, 0, 1, 1], [], []>} : vector<32x32xbf16>, vector<32x512xbf16>, vector<32x512xf32> -> vector<32x512xf32>
    %c0_9 = arith.constant 0 : index
    %c0_10 = arith.constant 0 : index
    %12 = vector.load %arg5[%c0_9, %c0_10] : memref<32x1xf32, #tpu.memory_space<vmem>>, vector<32x1xf32>
    %13 = vector.broadcast %12 : vector<32x1xf32> to vector<32x512xf32>
    %14 = arith.addf %11, %13 : vector<32x512xf32>
    %cst_11 = arith.constant 0.000000e+00 : f32
    %15 = vector.broadcast %cst_11 : f32 to vector<32x512xf32>
    %16 = arith.maximumf %14, %15 : vector<32x512xf32>
    %c0_12 = arith.constant 0 : index
    %c0_13 = arith.constant 0 : index
    %17 = vector.load %arg6[%c0_12, %c0_13] : memref<32x32xbf16, #tpu.memory_space<vmem>>, vector<32x32xbf16>
    %18 = arith.truncf %16 : vector<32x512xf32> to vector<32x512xbf16>
    %cst_14 = arith.constant dense<0.000000e+00> : vector<32x512xf32>
    %19 = tpu.matmul %17, %18, %cst_14 {dimension_numbers = #tpu.dot_dimension_numbers<[1], [0], [0], [1], [0, 0, 1, 1], [], []>} : vector<32x32xbf16>, vector<32x512xbf16>, vector<32x512xf32> -> vector<32x512xf32>
    %c0_15 = arith.constant 0 : index
    %c0_16 = arith.constant 0 : index
    %20 = vector.load %arg7[%c0_15, %c0_16] : memref<32x3xbf16, #tpu.memory_space<vmem>>, vector<32x3xbf16>
    %cst_17 = arith.constant dense<0.000000e+00> : vector<32x512xf32>
    %21 = tpu.matmul %20, %1, %cst_17 {dimension_numbers = #tpu.dot_dimension_numbers<[1], [0], [0], [1], [0, 0, 1, 1], [], []>} : vector<32x3xbf16>, vector<3x512xbf16>, vector<32x512xf32> -> vector<32x512xf32>
    %22 = arith.addf %19, %21 : vector<32x512xf32>
    %c0_18 = arith.constant 0 : index
    %c0_19 = arith.constant 0 : index
    %23 = vector.load %arg8[%c0_18, %c0_19] : memref<32x1xf32, #tpu.memory_space<vmem>>, vector<32x1xf32>
    %24 = vector.broadcast %23 : vector<32x1xf32> to vector<32x512xf32>
    %25 = arith.addf %22, %24 : vector<32x512xf32>
    %cst_20 = arith.constant 0.000000e+00 : f32
    %26 = vector.broadcast %cst_20 : f32 to vector<32x512xf32>
    %27 = arith.maximumf %25, %26 : vector<32x512xf32>
    %28 = arith.truncf %27 : vector<32x512xf32> to vector<32x512xbf16>
    %c0_21 = arith.constant 0 : index
    %c0_22 = arith.constant 0 : index
    %29 = vector.load %arg9[%c0_21, %c0_22] : memref<32x32xbf16, #tpu.memory_space<vmem>>, vector<32x32xbf16>
    %cst_23 = arith.constant dense<0.000000e+00> : vector<32x512xf32>
    %30 = tpu.matmul %29, %28, %cst_23 {dimension_numbers = #tpu.dot_dimension_numbers<[1], [0], [0], [1], [0, 0, 1, 1], [], []>} : vector<32x32xbf16>, vector<32x512xbf16>, vector<32x512xf32> -> vector<32x512xf32>
    %c0_24 = arith.constant 0 : index
    %c0_25 = arith.constant 0 : index
    %31 = vector.load %arg10[%c0_24, %c0_25] : memref<32x1xf32, #tpu.memory_space<vmem>>, vector<32x1xf32>
    %32 = vector.broadcast %31 : vector<32x1xf32> to vector<32x512xf32>
    %33 = arith.addf %30, %32 : vector<32x512xf32>
    %cst_26 = arith.constant 0.000000e+00 : f32
    %34 = vector.broadcast %cst_26 : f32 to vector<32x512xf32>
    %35 = arith.maximumf %33, %34 : vector<32x512xf32>
    %36 = arith.truncf %35 : vector<32x512xf32> to vector<32x512xbf16>
    %c0_27 = arith.constant 0 : index
    %c0_28 = arith.constant 0 : index
    %37 = vector.load %arg11[%c0_27, %c0_28] : memref<8x32xbf16, #tpu.memory_space<vmem>>, vector<8x32xbf16>
    %cst_29 = arith.constant dense<0.000000e+00> : vector<8x512xf32>
    %38 = tpu.matmul %37, %36, %cst_29 {dimension_numbers = #tpu.dot_dimension_numbers<[1], [0], [0], [1], [0, 0, 1, 1], [], []>} : vector<8x32xbf16>, vector<32x512xbf16>, vector<8x512xf32> -> vector<8x512xf32>
    %c0_30 = arith.constant 0 : index
    %c0_31 = arith.constant 0 : index
    %39 = vector.load %arg12[%c0_30, %c0_31] : memref<8x1xf32, #tpu.memory_space<vmem>>, vector<8x1xf32>
    %40 = vector.broadcast %39 : vector<8x1xf32> to vector<8x512xf32>
    %41 = arith.addf %38, %40 : vector<8x512xf32>
    %c0_32 = arith.constant 0 : index
    %c0_33 = arith.constant 0 : index
    %42 = vector.load %arg13[%c0_32, %c0_33] : memref<8x512xf32, #tpu.memory_space<vmem>>, vector<8x512xf32>
    tpu.vector_store %arg13[%c0_32, %c0_33], %41 {strides = array<i32>} : memref<8x512xf32, #tpu.memory_space<vmem>>, vector<8x512xf32>,
    return
  }
  func.func @transform_0(%arg0: i32) -> (i32, i32) {
    %c0_i32 = arith.constant 0 : i32
    %c0_i32_0 = arith.constant 0 : i32
    return %c0_i32, %arg0 : i32, i32
  }
  func.func @transform_1(%arg0: i32) -> (i32, i32) {
    %c0_i32 = arith.constant 0 : i32
    %c0_i32_0 = arith.constant 0 : i32
    %c0_i32_1 = arith.constant 0 : i32
    return %c0_i32, %c0_i32_0 : i32, i32
  }
  func.func @transform_2(%arg0: i32) -> (i32, i32) {
    %c0_i32 = arith.constant 0 : i32
    %c0_i32_0 = arith.constant 0 : i32
    %c0_i32_1 = arith.constant 0 : i32
    return %c0_i32, %c0_i32_0 : i32, i32
  }
  func.func @transform_3(%arg0: i32) -> (i32, i32) {
    %c0_i32 = arith.constant 0 : i32
    %c0_i32_0 = arith.constant 0 : i32
    %c0_i32_1 = arith.constant 0 : i32
    return %c0_i32, %c0_i32_0 : i32, i32
  }
  func.func @transform_4(%arg0: i32) -> (i32, i32) {
    %c0_i32 = arith.constant 0 : i32
    %c0_i32_0 = arith.constant 0 : i32
    %c0_i32_1 = arith.constant 0 : i32
    return %c0_i32, %c0_i32_0 : i32, i32
  }
  func.func @transform_5(%arg0: i32) -> (i32, i32) {
    %c0_i32 = arith.constant 0 : i32
    %c0_i32_0 = arith.constant 0 : i32
    %c0_i32_1 = arith.constant 0 : i32
    return %c0_i32, %c0_i32_0 : i32, i32
  }
  func.func @transform_6(%arg0: i32) -> (i32, i32) {
    %c0_i32 = arith.constant 0 : i32
    %c0_i32_0 = arith.constant 0 : i32
    %c0_i32_1 = arith.constant 0 : i32
    return %c0_i32, %c0_i32_0 : i32, i32
  }
  func.func @transform_7(%arg0: i32) -> (i32, i32) {
    %c0_i32 = arith.constant 0 : i32
    %c0_i32_0 = arith.constant 0 : i32
    %c0_i32_1 = arith.constant 0 : i32
    return %c0_i32, %c0_i32_0 : i32, i32
  }
  func.func @transform_8(%arg0: i32) -> (i32, i32) {
    %c0_i32 = arith.constant 0 : i32
    %c0_i32_0 = arith.constant 0 : i32
    %c0_i32_1 = arith.constant 0 : i32
    return %c0_i32, %c0_i32_0 : i32, i32
  }
  func.func @transform_9(%arg0: i32) -> (i32, i32) {
    %c0_i32 = arith.constant 0 : i32
    %c0_i32_0 = arith.constant 0 : i32
    %c0_i32_1 = arith.constant 0 : i32
    return %c0_i32, %c0_i32_0 : i32, i32
  }
  func.func @transform_10(%arg0: i32) -> (i32, i32) {
    %c0_i32 = arith.constant 0 : i32
    %c0_i32_0 = arith.constant 0 : i32
    %c0_i32_1 = arith.constant 0 : i32
    return %c0_i32, %c0_i32_0 : i32, i32
  }
  func.func @transform_11(%arg0: i32) -> (i32, i32) {
    %c0_i32 = arith.constant 0 : i32
    %c0_i32_0 = arith.constant 0 : i32
    %c0_i32_1 = arith.constant 0 : i32
    return %c0_i32, %c0_i32_0 : i32, i32
  }
  func.func @transform_12(%arg0: i32) -> (i32, i32) {
    %c0_i32 = arith.constant 0 : i32
    %c0_i32_0 = arith.constant 0 : i32
    return %c0_i32, %arg0 : i32, i32
  }
}

</mosaic_0001>

<llo_original>
// kernel: tpu_custom_call.1
$region0: #{tpu_custom_call.1}
  #allocation0 [shape = 'u32[]', space=smem, size = 0x4, offset = 0x4, fixed_abs, tag = 'smem constant byte address 0x4 - core index']
  #allocation1 [shape = 'u32[144,128]{1,0:T(1,128)}', space=vmem, size = 0x12000, scoped, tag = 'internal scratch']
  %s0 = inlined_call_operand.vmem [shape: f32[3,2048], index: 0, kind: input, shape index: {}]
  %s1 = inlined_call_operand.vmem [shape: bf16[32,3], index: 1, kind: input, shape index: {}]
  %s2 = inlined_call_operand.vmem [shape: f32[32,1], index: 2, kind: input, shape index: {}]
  %s3 = inlined_call_operand.vmem [shape: bf16[32,32], index: 3, kind: input, shape index: {}]
  %s4 = inlined_call_operand.vmem [shape: f32[32,1], index: 4, kind: input, shape index: {}]
  %s5 = inlined_call_operand.vmem [shape: bf16[32,32], index: 5, kind: input, shape index: {}]
  %s6 = inlined_call_operand.vmem [shape: bf16[32,3], index: 6, kind: input, shape index: {}]
  %s7 = inlined_call_operand.vmem [shape: f32[32,1], index: 7, kind: input, shape index: {}]
  %s8 = inlined_call_operand.vmem [shape: bf16[32,32], index: 8, kind: input, shape index: {}]
  %s9 = inlined_call_operand.vmem [shape: f32[32,1], index: 9, kind: input, shape index: {}]
  %s10 = inlined_call_operand.vmem [shape: bf16[8,32], index: 10, kind: input, shape index: {}]
  %s11 = inlined_call_operand.vmem [shape: f32[8,1], index: 11, kind: input, shape index: {}]
  %s12 = inlined_call_operand.hbm [shape: f32[8,2048], index: 12, kind: output, shape index: {}]
  %s13 = sld [smem:[#allocation0]]
  $region81: #{tpu_custom_call.1} parent=0
    _
  %s15 = ssub.s32 1, %s13
  %s16 = scalar_select 0, %s15, %s13
  $region1: #{tpu_custom_call.1} parent=0
    #allocation2 [shape = 'u8[32768]{0}', space=vmem, size = 0x8000, scoped, tag = 'output window, operand 0']
    #allocation3 [shape = 's32[2]{0}', space=sflag, size = 0x8, scoped, tag = 'scoped memory for tpu_custom_call.1']
    %17 = vsyncpa [#allocation3], 0
    %s18 = scalar_lea.sflag [#allocation3], 1
    %19 = vsyncpa %s18, 0
    loop: start=0, step=1, limit=6
    $region2: #{tpu_custom_call.1} parent=1 // loop_pre_header
      _
    $region3: #{tpu_custom_call.1} parent=1 // loop_header
      %s21 = sphi 0, %s25
      %p22 = scmp.ge.s32.totalorder %s21, 6
      %s31 = sphi 0, %s33
      %s34 = sphi 0, %s31
      %s35 = sphi 0, %s34
      %s51 = sphi 0, %s35
      %s55 = sphi 0, %s55
      %s57 = sphi 0, %s55
      %s58 = sphi 0, %s57
      %s72 = sphi 0, %s58
      %s76 = sphi 0, %s76
      %s78 = sphi 0, %s76
      %s79 = sphi 0, %s78
      %s93 = sphi 0, %s79
      %s97 = sphi 0, %s97
      %s99 = sphi 0, %s97
      %s100 = sphi 0, %s99
      %s114 = sphi 0, %s100
      %s118 = sphi 0, %s118
      %s120 = sphi 0, %s118
      %s121 = sphi 0, %s120
      %s135 = sphi 0, %s121
      %s139 = sphi 0, %s139
      %s141 = sphi 0, %s139
      %s142 = sphi 0, %s141
      %s156 = sphi 0, %s142
      %s160 = sphi 0, %s160
      %s162 = sphi 0, %s160
      %s163 = sphi 0, %s162
      %s177 = sphi 0, %s163
      %s181 = sphi 0, %s181
      %s183 = sphi 0, %s181
      %s184 = sphi 0, %s183
      %s198 = sphi 0, %s184
      %s202 = sphi 0, %s202
      %s204 = sphi 0, %s202
      %s205 = sphi 0, %s204
      %s219 = sphi 0, %s205
      %s223 = sphi 0, %s223
      %s225 = sphi 0, %s223
      %s226 = sphi 0, %s225
      %s240 = sphi 0, %s226
      %s244 = sphi 0, %s244
      %s246 = sphi 0, %s244
      %s247 = sphi 0, %s246
      %s261 = sphi 0, %s247
      %s265 = sphi 0, %s265
      %s267 = sphi 0, %s265
      %s268 = sphi 0, %s267
      %s282 = sphi 0, %s268
      %s288 = sphi 0, %s290
      %s291 = sphi 0, %s288
      %s292 = sphi 0, %s291
      %s308 = sphi 0, %s292
    $region4: #{tpu_custom_call.1} parent=1 // loop_header_branch
      %24 = sbr.rel (%p22) target = $region8
    $region5: #{tpu_custom_call.1} parent=1 // loop_body
      %s26 = ssub.s32 %s21, 1
      %s27 = ssub.s32 %s21, 2
      %s28 = sadd.s32 %s21, 1
      %s29 = ssub.s32 %s21, %s28
      %p30 = scmp.eq.s32.totalorder %s29, 0
      %s32 = sadd.s32 %s31, 1
      %s33 = scalar_select %p30, %s31, %s32
      %p36 = pneg %p30
      %p37 = scmp.eq.s32.totalorder %s21, 3
      %p38 = por %p36, %p37
      %p39 = scmp.ne.s32.totalorder %s31, %s34
      %p40 = scmp.eq.s32.totalorder %s21, 0
      %p41 = por %p39, %p40
      %p42 = scmp.ne.s32.totalorder %s31, %s34
      %p43 = scmp.eq.s32.totalorder %s26, 3
      %p44 = por %p42, %p43
      %p45 = scmp.ne.s32.totalorder %s34, %s35
      %p46 = scmp.eq.s32.totalorder %s26, 0
      %p47 = por %p45, %p46
      %p48 = scmp.ne.s32.totalorder %s34, %s35
      %p49 = scmp.eq.s32.totalorder %s27, 3
      %p50 = por %p48, %p49
      %p52 = scmp.ne.s32.totalorder %s35, %s51
      %p53 = scmp.eq.s32.totalorder %s27, 0
      %p54 = por %p52, %p53
      %s56 = sadd.s32 %s55, 1
      %p59 = scmp.eq.s32.totalorder %s21, 3
      %p60 = scmp.ne.s32.totalorder %s55, %s57
      %p61 = scmp.eq.s32.totalorder %s21, 0
      %p62 = por %p60, %p61
      %p63 = scmp.ne.s32.totalorder %s55, %s57
      %p64 = scmp.eq.s32.totalorder %s26, 3
      %p65 = por %p63, %p64
      %p66 = scmp.ne.s32.totalorder %s57, %s58
      %p67 = scmp.eq.s32.totalorder %s26, 0
      %p68 = por %p66, %p67
      %p69 = scmp.ne.s32.totalorder %s57, %s58
      %p70 = scmp.eq.s32.totalorder %s27, 3
      %p71 = por %p69, %p70
      %p73 = scmp.ne.s32.totalorder %s58, %s72
      %p74 = scmp.eq.s32.totalorder %s27, 0
      %p75 = por %p73, %p74
      %s77 = sadd.s32 %s76, 1
      %p80 = scmp.eq.s32.totalorder %s21, 3
      %p81 = scmp.ne.s32.totalorder %s76, %s78
      %p82 = scmp.eq.s32.totalorder %s21, 0
      %p83 = por %p81, %p82
      %p84 = scmp.ne.s32.totalorder %s76, %s78
      %p85 = scmp.eq.s32.totalorder %s26, 3
      %p86 = por %p84, %p85
      %p87 = scmp.ne.s32.totalorder %s78, %s79
      %p88 = scmp.eq.s32.totalorder %s26, 0
      %p89 = por %p87, %p88
      %p90 = scmp.ne.s32.totalorder %s78, %s79
      %p91 = scmp.eq.s32.totalorder %s27, 3
      %p92 = por %p90, %p91
      %p94 = scmp.ne.s32.totalorder %s79, %s93
      %p95 = scmp.eq.s32.totalorder %s27, 0
      %p96 = por %p94, %p95
      %s98 = sadd.s32 %s97, 1
      %p101 = scmp.eq.s32.totalorder %s21, 3
      %p102 = scmp.ne.s32.totalorder %s97, %s99
      %p103 = scmp.eq.s32.totalorder %s21, 0
      %p104 = por %p102, %p103
      %p105 = scmp.ne.s32.totalorder %s97, %s99
      %p106 = scmp.eq.s32.totalorder %s26, 3
      %p107 = por %p105, %p106
      %p108 = scmp.ne.s32.totalorder %s99, %s100
      %p109 = scmp.eq.s32.totalorder %s26, 0
      %p110 = por %p108, %p109
      %p111 = scmp.ne.s32.totalorder %s99, %s100
      %p112 = scmp.eq.s32.totalorder %s27, 3
      %p113 = por %p111, %p112
      %p115 = scmp.ne.s32.totalorder %s100, %s114
      %p116 = scmp.eq.s32.totalorder %s27, 0
      %p117 = por %p115, %p116
      %s119 = sadd.s32 %s118, 1
      %p122 = scmp.eq.s32.totalorder %s21, 3
      %p123 = scmp.ne.s32.totalorder %s118, %s120
      %p124 = scmp.eq.s32.totalorder %s21, 0
      %p125 = por %p123, %p124
      %p126 = scmp.ne.s32.totalorder %s118, %s120
      %p127 = scmp.eq.s32.totalorder %s26, 3
      %p128 = por %p126, %p127
      %p129 = scmp.ne.s32.totalorder %s120, %s121
      %p130 = scmp.eq.s32.totalorder %s26, 0
      %p131 = por %p129, %p130
      %p132 = scmp.ne.s32.totalorder %s120, %s121
      %p133 = scmp.eq.s32.totalorder %s27, 3
      %p134 = por %p132, %p133
      %p136 = scmp.ne.s32.totalorder %s121, %s135
      %p137 = scmp.eq.s32.totalorder %s27, 0
      %p138 = por %p136, %p137
      %s140 = sadd.s32 %s139, 1
      %p143 = scmp.eq.s32.totalorder %s21, 3
      %p144 = scmp.ne.s32.totalorder %s139, %s141
      %p145 = scmp.eq.s32.totalorder %s21, 0
      %p146 = por %p144, %p145
      %p147 = scmp.ne.s32.totalorder %s139, %s141
      %p148 = scmp.eq.s32.totalorder %s26, 3
      %p149 = por %p147, %p148
      %p150 = scmp.ne.s32.totalorder %s141, %s142
      %p151 = scmp.eq.s32.totalorder %s26, 0
      %p152 = por %p150, %p151
      %p153 = scmp.ne.s32.totalorder %s141, %s142
      %p154 = scmp.eq.s32.totalorder %s27, 3
      %p155 = por %p153, %p154
      %p157 = scmp.ne.s32.totalorder %s142, %s156
      %p158 = scmp.eq.s32.totalorder %s27, 0
      %p159 = por %p157, %p158
      %s161 = sadd.s32 %s160, 1
      %p164 = scmp.eq.s32.totalorder %s21, 3
      %p165 = scmp.ne.s32.totalorder %s160, %s162
      %p166 = scmp.eq.s32.totalorder %s21, 0
      %p167 = por %p165, %p166
      %p168 = scmp.ne.s32.totalorder %s160, %s162
      %p169 = scmp.eq.s32.totalorder %s26, 3
      %p170 = por %p168, %p169
      %p171 = scmp.ne.s32.totalorder %s162, %s163
      %p172 = scmp.eq.s32.totalorder %s26, 0
      %p173 = por %p171, %p172
      %p174 = scmp.ne.s32.totalorder %s162, %s163
      %p175 = scmp.eq.s32.totalorder %s27, 3
      %p176 = por %p174, %p175
      %p178 = scmp.ne.s32.totalorder %s163, %s177
      %p179 = scmp.eq.s32.totalorder %s27, 0
      %p180 = por %p178, %p179
      %s182 = sadd.s32 %s181, 1
      %p185 = scmp.eq.s32.totalorder %s21, 3
      %p186 = scmp.ne.s32.totalorder %s181, %s183
      %p187 = scmp.eq.s32.totalorder %s21, 0
      %p188 = por %p186, %p187
      %p189 = scmp.ne.s32.totalorder %s181, %s183
      %p190 = scmp.eq.s32.totalorder %s26, 3
      %p191 = por %p189, %p190
      %p192 = scmp.ne.s32.totalorder %s183, %s184
      %p193 = scmp.eq.s32.totalorder %s26, 0
      %p194 = por %p192, %p193
      %p195 = scmp.ne.s32.totalorder %s183, %s184
      %p196 = scmp.eq.s32.totalorder %s27, 3
      %p197 = por %p195, %p196
      %p199 = scmp.ne.s32.totalorder %s184, %s198
      %p200 = scmp.eq.s32.totalorder %s27, 0
      %p201 = por %p199, %p200
      %s203 = sadd.s32 %s202, 1
      %p206 = scmp.eq.s32.totalorder %s21, 3
      %p207 = scmp.ne.s32.totalorder %s202, %s204
      %p208 = scmp.eq.s32.totalorder %s21, 0
      %p209 = por %p207, %p208
      %p210 = scmp.ne.s32.totalorder %s202, %s204
      %p211 = scmp.eq.s32.totalorder %s26, 3
      %p212 = por %p210, %p211
      %p213 = scmp.ne.s32.totalorder %s204, %s205
      %p214 = scmp.eq.s32.totalorder %s26, 0
      %p215 = por %p213, %p214
      %p216 = scmp.ne.s32.totalorder %s204, %s205
      %p217 = scmp.eq.s32.totalorder %s27, 3
      %p218 = por %p216, %p217
      %p220 = scmp.ne.s32.totalorder %s205, %s219
      %p221 = scmp.eq.s32.totalorder %s27, 0
      %p222 = por %p220, %p221
      %s224 = sadd.s32 %s223, 1
      %p227 = scmp.eq.s32.totalorder %s21, 3
      %p228 = scmp.ne.s32.totalorder %s223, %s225
      %p229 = scmp.eq.s32.totalorder %s21, 0
      %p230 = por %p228, %p229
      %p231 = scmp.ne.s32.totalorder %s223, %s225
      %p232 = scmp.eq.s32.totalorder %s26, 3
      %p233 = por %p231, %p232
      %p234 = scmp.ne.s32.totalorder %s225, %s226
      %p235 = scmp.eq.s32.totalorder %s26, 0
      %p236 = por %p234, %p235
      %p237 = scmp.ne.s32.totalorder %s225, %s226
      %p238 = scmp.eq.s32.totalorder %s27, 3
      %p239 = por %p237, %p238
      %p241 = scmp.ne.s32.totalorder %s226, %s240
      %p242 = scmp.eq.s32.totalorder %s27, 0
      %p243 = por %p241, %p242
      %s245 = sadd.s32 %s244, 1
      %p248 = scmp.eq.s32.totalorder %s21, 3
      %p249 = scmp.ne.s32.totalorder %s244, %s246
      %p250 = scmp.eq.s32.totalorder %s21, 0
      %p251 = por %p249, %p250
      %p252 = scmp.ne.s32.totalorder %s244, %s246
      %p253 = scmp.eq.s32.totalorder %s26, 3
      %p254 = por %p252, %p253
      %p255 = scmp.ne.s32.totalorder %s246, %s247
      %p256 = scmp.eq.s32.totalorder %s26, 0
      %p257 = por %p255, %p256
      %p258 = scmp.ne.s32.totalorder %s246, %s247
      %p259 = scmp.eq.s32.totalorder %s27, 3
      %p260 = por %p258, %p259
      %p262 = scmp.ne.s32.totalorder %s247, %s261
      %p263 = scmp.eq.s32.totalorder %s27, 0
      %p264 = por %p262, %p263
      %s266 = sadd.s32 %s265, 1
      %p269 = scmp.eq.s32.totalorder %s21, 3
      %p270 = scmp.ne.s32.totalorder %s265, %s267
      %p271 = scmp.eq.s32.totalorder %s21, 0
      %p272 = por %p270, %p271
      %p273 = scmp.ne.s32.totalorder %s265, %s267
      %p274 = scmp.eq.s32.totalorder %s26, 3
      %p275 = por %p273, %p274
      %p276 = scmp.ne.s32.totalorder %s267, %s268
      %p277 = scmp.eq.s32.totalorder %s26, 0
      %p278 = por %p276, %p277
      %p279 = scmp.ne.s32.totalorder %s267, %s268
      %p280 = scmp.eq.s32.totalorder %s27, 3
      %p281 = por %p279, %p280
      %p283 = scmp.ne.s32.totalorder %s268, %s282
      %p284 = scmp.eq.s32.totalorder %s27, 0
      %p285 = por %p283, %p284
      %s286 = ssub.s32 %s21, %s28
      %p287 = scmp.eq.s32.totalorder %s286, 0
      %s289 = sadd.s32 %s288, 1
      %s290 = scalar_select %p287, %s288, %s289
      %p293 = pneg %p287
      %p294 = scmp.eq.s32.totalorder %s21, 3
      %p295 = por %p293, %p294
      %p296 = scmp.ne.s32.totalorder %s288, %s291
      %p297 = scmp.eq.s32.totalorder %s21, 0
      %p298 = por %p296, %p297
      %p299 = scmp.ne.s32.totalorder %s288, %s291
      %p300 = scmp.eq.s32.totalorder %s26, 3
      %p301 = por %p299, %p300
      %p302 = scmp.ne.s32.totalorder %s291, %s292
      %p303 = scmp.eq.s32.totalorder %s26, 0
      %p304 = por %p302, %p303
      %p305 = scmp.ne.s32.totalorder %s291, %s292
      %p306 = scmp.eq.s32.totalorder %s27, 3
      %p307 = por %p305, %p306
      %p309 = scmp.ne.s32.totalorder %s292, %s308
      %p310 = scmp.eq.s32.totalorder %s27, 0
      %p311 = por %p309, %p310
      %p312 = scmp.le.s32.totalorder 1, %s21
      %p313 = scmp.lt.s32.totalorder %s21, 5
      %p314 = pnand %p312, %p313
      %p315 = pneg %p314
      // Predicated region
      $region9: #{tpu_custom_call.1} parent=5 // pred_check
        _
      $region10: #{tpu_custom_call.1} parent=5 // pred_check_branch
        %317 = sbr.rel (%p314) target = $region12
      $region11: #{tpu_custom_call.1} parent=5 // pred_region
        %s318 = ssub.s32 %s21, 1
        // Predicated region
        $region13: #{tpu_custom_call.1} parent=11 // pred_check
          %p319 = pneg %p68
        $region14: #{tpu_custom_call.1} parent=11 // pred_check_branch
          %321 = sbr.rel (%p319) target = $region16
        $region15: #{tpu_custom_call.1} parent=11 // pred_region
          _
        $region16: #{tpu_custom_call.1} parent=11 // pred_fallthru
          _
        // Predicated region
        $region17: #{tpu_custom_call.1} parent=11 // pred_check
          %p322 = pneg %p89
        $region18: #{tpu_custom_call.1} parent=11 // pred_check_branch
          %324 = sbr.rel (%p322) target = $region20
        $region19: #{tpu_custom_call.1} parent=11 // pred_region
          _
        $region20: #{tpu_custom_call.1} parent=11 // pred_fallthru
          _
        // Predicated region
        $region21: #{tpu_custom_call.1} parent=11 // pred_check
          %p325 = pneg %p110
        $region22: #{tpu_custom_call.1} parent=11 // pred_check_branch
          %327 = sbr.rel (%p325) target = $region24
        $region23: #{tpu_custom_call.1} parent=11 // pred_region
          _
        $region24: #{tpu_custom_call.1} parent=11 // pred_fallthru
          _
        // Predicated region
        $region25: #{tpu_custom_call.1} parent=11 // pred_check
          %p328 = pneg %p131
        $region26: #{tpu_custom_call.1} parent=11 // pred_check_branch
          %330 = sbr.rel (%p328) target = $region28
        $region27: #{tpu_custom_call.1} parent=11 // pred_region
          _
        $region28: #{tpu_custom_call.1} parent=11 // pred_fallthru
          _
        // Predicated region
        $region29: #{tpu_custom_call.1} parent=11 // pred_check
          %p331 = pneg %p152
        $region30: #{tpu_custom_call.1} parent=11 // pred_check_branch
          %333 = sbr.rel (%p331) target = $region32
        $region31: #{tpu_custom_call.1} parent=11 // pred_region
          _
        $region32: #{tpu_custom_call.1} parent=11 // pred_fallthru
          _
        // Predicated region
        $region33: #{tpu_custom_call.1} parent=11 // pred_check
          %p334 = pneg %p173
        $region34: #{tpu_custom_call.1} parent=11 // pred_check_branch
          %336 = sbr.rel (%p334) target = $region36
        $region35: #{tpu_custom_call.1} parent=11 // pred_region
          _
        $region36: #{tpu_custom_call.1} parent=11 // pred_fallthru
          _
        // Predicated region
        $region37: #{tpu_custom_call.1} parent=11 // pred_check
          %p337 = pneg %p194
        $region38: #{tpu_custom_call.1} parent=11 // pred_check_branch
          %339 = sbr.rel (%p337) target = $region40
        $region39: #{tpu_custom_call.1} parent=11 // pred_region
          _
        $region40: #{tpu_custom_call.1} parent=11 // pred_fallthru
          _
        // Predicated region
        $region41: #{tpu_custom_call.1} parent=11 // pred_check
          %p340 = pneg %p215
        $region42: #{tpu_custom_call.1} parent=11 // pred_check_branch
          %342 = sbr.rel (%p340) target = $region44
        $region43: #{tpu_custom_call.1} parent=11 // pred_region
          _
        $region44: #{tpu_custom_call.1} parent=11 // pred_fallthru
          _
        // Predicated region
        $region45: #{tpu_custom_call.1} parent=11 // pred_check
          %p343 = pneg %p236
        $region46: #{tpu_custom_call.1} parent=11 // pred_check_branch
          %345 = sbr.rel (%p343) target = $region48
        $region47: #{tpu_custom_call.1} parent=11 // pred_region
          _
        $region48: #{tpu_custom_call.1} parent=11 // pred_fallthru
          _
        // Predicated region
        $region49: #{tpu_custom_call.1} parent=11 // pred_check
          %p346 = pneg %p257
        $region50: #{tpu_custom_call.1} parent=11 // pred_check_branch
          %348 = sbr.rel (%p346) target = $region52
        $region51: #{tpu_custom_call.1} parent=11 // pred_region
          _
        $region52: #{tpu_custom_call.1} parent=11 // pred_fallthru
          _
        // Predicated region
        $region53: #{tpu_custom_call.1} parent=11 // pred_check
          %p349 = pneg %p278
        $region54: #{tpu_custom_call.1} parent=11 // pred_check_branch
          %351 = sbr.rel (%p349) target = $region56
        $region55: #{tpu_custom_call.1} parent=11 // pred_region
          _
        $region56: #{tpu_custom_call.1} parent=11 // pred_fallthru
          _
      $region12: #{tpu_custom_call.1} parent=5 // pred_fallthru
        _
      %p352 = scmp.lt.s32.totalorder %s21, 4
      // Predicated region
      $region57: #{tpu_custom_call.1} parent=5 // pred_check
        %p353 = pneg %p352
      $region58: #{tpu_custom_call.1} parent=5 // pred_check_branch
        %355 = sbr.rel (%p353) target = $region60
      $region59: #{tpu_custom_call.1} parent=5 // pred_region
        // Predicated region
        $region61: #{tpu_custom_call.1} parent=59 // pred_check
          %p356 = pneg %p41
        $region62: #{tpu_custom_call.1} parent=59 // pred_check_branch
          %358 = sbr.rel (%p356) target = $region64
        $region63: #{tpu_custom_call.1} parent=59 // pred_region
          %s359 = smul.u32 4, %s21
          %p360 = scmp.lt.s32.totalorder %s359, 15
          %s361 = scalar_select %p360, %s359, 15
          %s362 = smul.addr %s361, 4
          %s363 = scalar_lea.vmem %s0, %s362
          %s364 = smul.u32 4, %s21
        $region64: #{tpu_custom_call.1} parent=59 // pred_fallthru
          _
      $region60: #{tpu_custom_call.1} parent=5 // pred_fallthru
        _
      %p365 = scmp.le.s32.totalorder 1, %s21
      %p366 = scmp.lt.s32.totalorder %s21, 5
      %p367 = pnand %p365, %p366
      %p368 = pneg %p367
      // Predicated region
      $region65: #{tpu_custom_call.1} parent=5 // pred_check
        _
      $region66: #{tpu_custom_call.1} parent=5 // pred_check_branch
        %370 = sbr.rel (%p367) target = $region68
      $region67: #{tpu_custom_call.1} parent=5 // pred_region
        %s371 = ssub.s32 %s21, 1
        %s372 = smul.u32 4, %s26
        %p373 = scmp.lt.s32.totalorder %s372, 15
        %s374 = scalar_select %p373, %s372, 15
        %s375 = smul.addr %s374, 4
        %s376 = scalar_lea.vmem %s0, %s375
        %p377 = pneg %p47
        %p378 = pneg %p44
        %p379 = pneg %p68
        %p380 = pneg %p65
        %p381 = pneg %p89
        %p382 = pneg %p86
        %p383 = pneg %p110
        %p384 = pneg %p107
        %p385 = pneg %p131
        %p386 = pneg %p128
        %p387 = pneg %p152
        %p388 = pneg %p149
        %p389 = pneg %p173
        %p390 = pneg %p170
        %p391 = pneg %p194
        %p392 = pneg %p191
        %p393 = pneg %p215
        %p394 = pneg %p212
        %p395 = pneg %p236
        %p396 = pneg %p233
        %p397 = pneg %p257
        %p398 = pneg %p254
        %p399 = pneg %p278
        %p400 = pneg %p275
        %p401 = pneg %p304
        %p402 = pneg %p301
        %s403 = sand.u32 %s291, 1
        %s404 = scalar_lea.sflag [#allocation3], %s403
        %s405 = sand.u32 %s291, 1
        %s406 = smul.addr %s405, 32
        %s407 = scalar_lea.vmem [#allocation2], %s406
        %s408 = smul.u32 4, %s26
        %p409 = scmp.lt.s32.totalorder %s408, 15
        %s410 = scalar_select %p409, %s408, 15
        %s411 = smul.addr %s410, 4
        %s412 = scalar_lea.vmem %s0, %s411
        %s413 = smul.u32 4, %s26
        %s414 = smul.u32 4, %s26
        %v416 = vld [vmem:[%s412] sm:$0x77]
        %v417 = vld [vmem:[%s412 + $0x8] sm:$0x77]
        %v420 = vcombine.high %v416, %v416
        %v421 = vcombine.high %v417, %v417
        %v424 = vpack.c.bf16 %v416, %v416
        %v425 = vpack.c.bf16 %v420, %v420
        %v426 = vpack.c.bf16 %v417, %v417
        %v427 = vpack.c.bf16 %v421, %v421
        %v428 = vld [vmem:[%s1] sm:$0xf]
        %v429 = vld [vmem:[%s1 + $0x4] sm:$0xf]
        %v430 = vld [vmem:[%s1 + $0x8] sm:$0xf]
        %v431 = vld [vmem:[%s1 + $0xc] sm:$0xf]
        %v432 = vld [vmem:[%s2] sm:$0xff]
        %v433 = vld [vmem:[%s2 + $0x8] sm:$0xff]
        %v434 = vld [vmem:[%s2 + $0x10] sm:$0xff]
        %v435 = vld [vmem:[%s2 + $0x18] sm:$0xff]
        %437 = vset.pattern.permute.xlu0 0
        %438 = vperm.xlu0 %437, %v432
        %v439 = vpop.permute.xlu0 %438
        %442 = vset.pattern.permute.xlu0 0
        %443 = vperm.xlu0 %442, %v433
        %v444 = vpop.permute.xlu0 %443
        %447 = vset.pattern.permute.xlu0 0
        %448 = vperm.xlu0 %447, %v434
        %v449 = vpop.permute.xlu0 %448
        %452 = vset.pattern.permute.xlu0 0
        %453 = vperm.xlu0 %452, %v435
        %v454 = vpop.permute.xlu0 %453
        %v460 = vunpack.c.l.b16 %v428
        %v461 = vunpack.c.l.b16 %v429
        %v462 = vunpack.c.l.b16 %v430
        %v463 = vunpack.c.l.b16 %v431
        %v464 = vpack.c.b16 %v461, %v460
        %v465 = vpack.c.b16 %v463, %v462
        %vm466 = vcmask 23552
        %v468 = vsel %vm466, %v464, 0
        %v471 = vsel %vm466, %v465, 0
        %vm473 = vcmask 1040384
        %vm474 = vcmask 1041408
        %v475 = vsel %vm473, 4294967295, 65535
        %v476 = vsel %vm474, %v475, 0
        %v478 = vand.u32 %v424, %v476
        %v481 = vand.u32 %v425, %v476
        %v484 = vand.u32 %v426, %v476
        %v487 = vand.u32 %v427, %v476
        %489 = vmatprep.subr.bf16.mxu0 %v481
        %490 = vmatpush1.bf16.msra.mxu0 %v478
        %491 = vmatprep.subr.bf16.mxu0 0
        %492 = vmatpush1.bf16.msra.mxu0 0
        %493 = vmatprep.subr.bf16.mxu0 0
        %494 = vmatpush1.bf16.msra.mxu0 0
        %495 = vmatprep.subr.bf16.mxu0 0
        %496 = vmatpush1.bf16.msra.mxu0 0
        %497 = vmatprep.subr.bf16.mxu0 0
        %498 = vmatpush1.bf16.msra.mxu0 0
        %499 = vmatprep.subr.bf16.mxu0 0
        %500 = vmatpush1.bf16.msra.mxu0 0
        %501 = vmatprep.subr.bf16.mxu0 0
        %502 = vmatpush1.bf16.msra.mxu0 0
        %503 = vmatprep.subr.bf16.mxu0 0
        %504 = vmatpush1.bf16.msra.mxu0 0
        %505 = vmatprep.subr.bf16.mxu0 0
        %506 = vmatpush1.bf16.msra.mxu0 0
        %507 = vmatprep.subr.bf16.mxu0 0
        %508 = vmatpush1.bf16.msra.mxu0 0
        %509 = vmatprep.subr.bf16.mxu0 0
        %510 = vmatpush1.bf16.msra.mxu0 0
        %511 = vmatprep.subr.bf16.mxu0 0
        %512 = vmatpush1.bf16.msra.mxu0 0
        %513 = vmatprep.subr.bf16.mxu0 0
        %514 = vmatpush1.bf16.msra.mxu0 0
        %515 = vmatprep.subr.bf16.mxu0 0
        %516 = vmatpush1.bf16.msra.mxu0 0
        %517 = vmatprep.subr.bf16.mxu0 0
        %518 = vmatpush1.bf16.msra.mxu0 0
        %519 = vmatprep.subr.bf16.mxu0 0
        %520 = vmatpush1.bf16.msra.mxu0 0
        %521 = vmatprep.mubr.bf16.mxu0 0
        %522 = vmatmul.mubr.bf16.gmra.mrb[0].mxu0 %v468
        %v523 = vpop.f32.mrb[0].mxu0
        %v524 = vadd.f32 %v439, %v523
        %v525 = vpop.f32.mrb[0].mxu0
        %v526 = vadd.f32 %v439, %v525
        %v527 = vpop.f32.mrb[0].mxu0
        %v528 = vadd.f32 %v444, %v527
        %v529 = vpop.f32.mrb[0].mxu0
        %v530 = vadd.f32 %v444, %v529
        %531 = vmatprep.mubr.bf16.mxu0 0
        %532 = vmatmul.mubr.bf16.gmra.mrb[0].mxu0 %v471
        %v533 = vpop.f32.mrb[0].mxu0
        %v534 = vadd.f32 %v449, %v533
        %v535 = vpop.f32.mrb[0].mxu0
        %v536 = vadd.f32 %v449, %v535
        %v537 = vpop.f32.mrb[0].mxu0
        %v538 = vadd.f32 %v454, %v537
        %v539 = vpop.f32.mrb[0].mxu0
        %v540 = vadd.f32 %v454, %v539
        %541 = vdwg.mxu0
        %542 = vmatprep.subr.bf16.mxu0 %v487
        %543 = vmatpush1.bf16.msra.mxu0 %v484
        %544 = vmatprep.subr.bf16.mxu0 0
        %545 = vmatpush1.bf16.msra.mxu0 0
        %546 = vmatprep.subr.bf16.mxu0 0
        %547 = vmatpush1.bf16.msra.mxu0 0
        %548 = vmatprep.subr.bf16.mxu0 0
        %549 = vmatpush1.bf16.msra.mxu0 0
        %550 = vmatprep.subr.bf16.mxu0 0
        %551 = vmatpush1.bf16.msra.mxu0 0
        %552 = vmatprep.subr.bf16.mxu0 0
        %553 = vmatpush1.bf16.msra.mxu0 0
        %554 = vmatprep.subr.bf16.mxu0 0
        %555 = vmatpush1.bf16.msra.mxu0 0
        %556 = vmatprep.subr.bf16.mxu0 0
        %557 = vmatpush1.bf16.msra.mxu0 0
        %558 = vmatprep.subr.bf16.mxu0 0
        %559 = vmatpush1.bf16.msra.mxu0 0
        %560 = vmatprep.subr.bf16.mxu0 0
        %561 = vmatpush1.bf16.msra.mxu0 0
        %562 = vmatprep.subr.bf16.mxu0 0
        %563 = vmatpush1.bf16.msra.mxu0 0
        %564 = vmatprep.subr.bf16.mxu0 0
        %565 = vmatpush1.bf16.msra.mxu0 0
        %566 = vmatprep.subr.bf16.mxu0 0
        %567 = vmatpush1.bf16.msra.mxu0 0
        %568 = vmatprep.subr.bf16.mxu0 0
        %569 = vmatpush1.bf16.msra.mxu0 0
        %570 = vmatprep.subr.bf16.mxu0 0
        %571 = vmatpush1.bf16.msra.mxu0 0
        %572 = vmatprep.subr.bf16.mxu0 0
        %573 = vmatpush1.bf16.msra.mxu0 0
        %574 = vmatprep.mubr.bf16.mxu0 0
        %575 = vmatmul.mubr.bf16.gmra.mrb[0].mxu0 %v468
        %v576 = vpop.f32.mrb[0].mxu0
        %v577 = vadd.f32 %v439, %v576
        %v578 = vpop.f32.mrb[0].mxu0
        %v579 = vadd.f32 %v439, %v578
        %v580 = vpop.f32.mrb[0].mxu0
        %v581 = vadd.f32 %v444, %v580
        %v582 = vpop.f32.mrb[0].mxu0
        %v583 = vadd.f32 %v444, %v582
        %584 = vmatprep.mubr.bf16.mxu0 0
        %585 = vmatmul.mubr.bf16.gmra.mrb[0].mxu0 %v471
        %v586 = vpop.f32.mrb[0].mxu0
        %v587 = vadd.f32 %v449, %v586
        %v588 = vpop.f32.mrb[0].mxu0
        %v589 = vadd.f32 %v449, %v588
        %v590 = vpop.f32.mrb[0].mxu0
        %v591 = vadd.f32 %v454, %v590
        %v592 = vpop.f32.mrb[0].mxu0
        %v593 = vadd.f32 %v454, %v592
        %594 = vdwg.mxu0
        %v595 = vmax.f32 %v524, 0.0
        %v596 = vmax.f32 %v526, 0.0
        %v597 = vmax.f32 %v577, 0.0
        %v598 = vmax.f32 %v579, 0.0
        %v599 = vmax.f32 %v528, 0.0
        %v600 = vmax.f32 %v530, 0.0
        %v601 = vmax.f32 %v581, 0.0
        %v602 = vmax.f32 %v583, 0.0
        %v603 = vmax.f32 %v534, 0.0
        %v604 = vmax.f32 %v536, 0.0
        %v605 = vmax.f32 %v587, 0.0
        %v606 = vmax.f32 %v589, 0.0
        %v607 = vmax.f32 %v538, 0.0
        %v608 = vmax.f32 %v540, 0.0
        %v609 = vmax.f32 %v591, 0.0
        %v610 = vmax.f32 %v593, 0.0
        %v611 = vpack.c.bf16 %v599, %v595
        %v612 = vpack.c.bf16 %v600, %v596
        %v613 = vpack.c.bf16 %v601, %v597
        %v614 = vpack.c.bf16 %v602, %v598
        %v615 = vpack.c.bf16 %v607, %v603
        %v616 = vpack.c.bf16 %v608, %v604
        %v617 = vpack.c.bf16 %v609, %v605
        %v618 = vpack.c.bf16 %v610, %v606
        %v619 = vld [vmem:[%s3] sm:$0xf]
        %v620 = vld [vmem:[%s3 + $0x4] sm:$0xf]
        %v621 = vld [vmem:[%s3 + $0x8] sm:$0xf]
        %v622 = vld [vmem:[%s3 + $0xc] sm:$0xf]
        %v623 = vld [vmem:[%s4] sm:$0xff]
        %v624 = vld [vmem:[%s4 + $0x8] sm:$0xff]
        %v625 = vld [vmem:[%s4 + $0x10] sm:$0xff]
        %v626 = vld [vmem:[%s4 + $0x18] sm:$0xff]
        %628 = vset.pattern.permute.xlu0 0
        %629 = vperm.xlu0 %628, %v623
        %v630 = vpop.permute.xlu0 %629
        %633 = vset.pattern.permute.xlu0 0
        %634 = vperm.xlu0 %633, %v624
        %v635 = vpop.permute.xlu0 %634
        %638 = vset.pattern.permute.xlu0 0
        %639 = vperm.xlu0 %638, %v625
        %v640 = vpop.permute.xlu0 %639
        %643 = vset.pattern.permute.xlu0 0
        %644 = vperm.xlu0 %643, %v626
        %v645 = vpop.permute.xlu0 %644
        %v651 = vunpack.c.l.b16 %v619
        %v652 = vunpack.c.l.b16 %v620
        %v653 = vunpack.c.l.b16 %v621
        %v654 = vunpack.c.l.b16 %v622
        %v655 = vpack.c.b16 %v652, %v651
        %v656 = vpack.c.b16 %v654, %v653
        %vm657 = vcmask 261120
        %v659 = vsel %vm657, %v655, 0
        %v662 = vsel %vm657, %v656, 0
        %664 = vmatprep.subr.bf16.mxu0 %v612
        %665 = vmatpush1.bf16.msra.mxu0 %v611
        %666 = vmatprep.subr.bf16.mxu0 %v616
        %667 = vmatpush1.bf16.msra.mxu0 %v615
        %668 = vmatprep.subr.bf16.mxu0 0
        %669 = vmatpush1.bf16.msra.mxu0 0
        %670 = vmatprep.subr.bf16.mxu0 0
        %671 = vmatpush1.bf16.msra.mxu0 0
        %672 = vmatprep.subr.bf16.mxu0 0
        %673 = vmatpush1.bf16.msra.mxu0 0
        %674 = vmatprep.subr.bf16.mxu0 0
        %675 = vmatpush1.bf16.msra.mxu0 0
        %676 = vmatprep.subr.bf16.mxu0 0
        %677 = vmatpush1.bf16.msra.mxu0 0
        %678 = vmatprep.subr.bf16.mxu0 0
        %679 = vmatpush1.bf16.msra.mxu0 0
        %680 = vmatprep.subr.bf16.mxu0 0
        %681 = vmatpush1.bf16.msra.mxu0 0
        %682 = vmatprep.subr.bf16.mxu0 0
        %683 = vmatpush1.bf16.msra.mxu0 0
        %684 = vmatprep.subr.bf16.mxu0 0
        %685 = vmatpush1.bf16.msra.mxu0 0
        %686 = vmatprep.subr.bf16.mxu0 0
        %687 = vmatpush1.bf16.msra.mxu0 0
        %688 = vmatprep.subr.bf16.mxu0 0
        %689 = vmatpush1.bf16.msra.mxu0 0
        %690 = vmatprep.subr.bf16.mxu0 0
        %691 = vmatpush1.bf16.msra.mxu0 0
        %692 = vmatprep.subr.bf16.mxu0 0
        %693 = vmatpush1.bf16.msra.mxu0 0
        %694 = vmatprep.subr.bf16.mxu0 0
        %695 = vmatpush1.bf16.msra.mxu0 0
        %696 = vmatprep.mubr.bf16.mxu0 0
        %697 = vmatmul.mubr.bf16.gmra.mrb[0].mxu0 %v659
        %v698 = vpop.f32.mrb[0].mxu0
        %v699 = vadd.f32 %v630, %v698
        %v700 = vpop.f32.mrb[0].mxu0
        %v701 = vadd.f32 %v630, %v700
        %v702 = vpop.f32.mrb[0].mxu0
        %v703 = vadd.f32 %v635, %v702
        %v704 = vpop.f32.mrb[0].mxu0
        %v705 = vadd.f32 %v635, %v704
        %706 = vmatprep.mubr.bf16.mxu0 0
        %707 = vmatmul.mubr.bf16.gmra.mrb[0].mxu0 %v662
        %v708 = vpop.f32.mrb[0].mxu0
        %v709 = vadd.f32 %v640, %v708
        %v710 = vpop.f32.mrb[0].mxu0
        %v711 = vadd.f32 %v640, %v710
        %v712 = vpop.f32.mrb[0].mxu0
        %v713 = vadd.f32 %v645, %v712
        %v714 = vpop.f32.mrb[0].mxu0
        %v715 = vadd.f32 %v645, %v714
        %716 = vdwg.mxu0
        %717 = vmatprep.subr.bf16.mxu0 %v614
        %718 = vmatpush1.bf16.msra.mxu0 %v613
        %719 = vmatprep.subr.bf16.mxu0 %v618
        %720 = vmatpush1.bf16.msra.mxu0 %v617
        %721 = vmatprep.subr.bf16.mxu0 0
        %722 = vmatpush1.bf16.msra.mxu0 0
        %723 = vmatprep.subr.bf16.mxu0 0
        %724 = vmatpush1.bf16.msra.mxu0 0
        %725 = vmatprep.subr.bf16.mxu0 0
        %726 = vmatpush1.bf16.msra.mxu0 0
        %727 = vmatprep.subr.bf16.mxu0 0
        %728 = vmatpush1.bf16.msra.mxu0 0
        %729 = vmatprep.subr.bf16.mxu0 0
        %730 = vmatpush1.bf16.msra.mxu0 0
        %731 = vmatprep.subr.bf16.mxu0 0
        %732 = vmatpush1.bf16.msra.mxu0 0
        %733 = vmatprep.subr.bf16.mxu0 0
        %734 = vmatpush1.bf16.msra.mxu0 0
        %735 = vmatprep.subr.bf16.mxu0 0
        %736 = vmatpush1.bf16.msra.mxu0 0
        %737 = vmatprep.subr.bf16.mxu0 0
        %738 = vmatpush1.bf16.msra.mxu0 0
        %739 = vmatprep.subr.bf16.mxu0 0
        %740 = vmatpush1.bf16.msra.mxu0 0
        %741 = vmatprep.subr.bf16.mxu0 0
        %742 = vmatpush1.bf16.msra.mxu0 0
        %743 = vmatprep.subr.bf16.mxu0 0
        %744 = vmatpush1.bf16.msra.mxu0 0
        %745 = vmatprep.subr.bf16.mxu0 0
        %746 = vmatpush1.bf16.msra.mxu0 0
        %747 = vmatprep.subr.bf16.mxu0 0
        %748 = vmatpush1.bf16.msra.mxu0 0
        %749 = vmatprep.mubr.bf16.mxu0 0
        %750 = vmatmul.mubr.bf16.gmra.mrb[0].mxu0 %v659
        %v751 = vpop.f32.mrb[0].mxu0
        %v752 = vadd.f32 %v630, %v751
        %v753 = vpop.f32.mrb[0].mxu0
        %v754 = vadd.f32 %v630, %v753
        %v755 = vpop.f32.mrb[0].mxu0
        %v756 = vadd.f32 %v635, %v755
        %v757 = vpop.f32.mrb[0].mxu0
        %v758 = vadd.f32 %v635, %v757
        %759 = vmatprep.mubr.bf16.mxu0 0
        %760 = vmatmul.mubr.bf16.gmra.mrb[0].mxu0 %v662
        %v761 = vpop.f32.mrb[0].mxu0
        %v762 = vadd.f32 %v640, %v761
        %v763 = vpop.f32.mrb[0].mxu0
        %v764 = vadd.f32 %v640, %v763
        %v765 = vpop.f32.mrb[0].mxu0
        %v766 = vadd.f32 %v645, %v765
        %v767 = vpop.f32.mrb[0].mxu0
        %v768 = vadd.f32 %v645, %v767
        %769 = vdwg.mxu0
        %v770 = vmax.f32 %v699, 0.0
        %v771 = vmax.f32 %v701, 0.0
        %v772 = vmax.f32 %v752, 0.0
        %v773 = vmax.f32 %v754, 0.0
        %v774 = vmax.f32 %v703, 0.0
        %v775 = vmax.f32 %v705, 0.0
        %v776 = vmax.f32 %v756, 0.0
        %v777 = vmax.f32 %v758, 0.0
        %v778 = vmax.f32 %v709, 0.0
        %v779 = vmax.f32 %v711, 0.0
        %v780 = vmax.f32 %v762, 0.0
        %v781 = vmax.f32 %v764, 0.0
        %v782 = vmax.f32 %v713, 0.0
        %v783 = vmax.f32 %v715, 0.0
        %v784 = vmax.f32 %v766, 0.0
        %v785 = vmax.f32 %v768, 0.0
        %v786 = vld [vmem:[%s5] sm:$0xf]
        %v787 = vld [vmem:[%s5 + $0x4] sm:$0xf]
        %v788 = vld [vmem:[%s5 + $0x8] sm:$0xf]
        %v789 = vld [vmem:[%s5 + $0xc] sm:$0xf]
        %v790 = vpack.c.bf16 %v774, %v770
        %v791 = vpack.c.bf16 %v775, %v771
        %v792 = vpack.c.bf16 %v776, %v772
        %v793 = vpack.c.bf16 %v777, %v773
        %v794 = vpack.c.bf16 %v782, %v778
        %v795 = vpack.c.bf16 %v783, %v779
        %v796 = vpack.c.bf16 %v784, %v780
        %v797 = vpack.c.bf16 %v785, %v781
        %v798 = vld [vmem:[%s6] sm:$0xf]
        %v799 = vld [vmem:[%s6 + $0x4] sm:$0xf]
        %v800 = vld [vmem:[%s6 + $0x8] sm:$0xf]
        %v801 = vld [vmem:[%s6 + $0xc] sm:$0xf]
        %v806 = vunpack.c.l.b16 %v798
        %v807 = vunpack.c.l.b16 %v799
        %v808 = vunpack.c.l.b16 %v800
        %v809 = vunpack.c.l.b16 %v801
        %v810 = vpack.c.b16 %v807, %v806
        %v811 = vpack.c.b16 %v809, %v808
        %v813 = vsel %vm466, %v810, 0
        %v816 = vsel %vm466, %v811, 0
        %818 = vmatprep.subr.bf16.mxu0 %v481
        %819 = vmatpush1.bf16.msra.mxu0 %v478
        %820 = vmatprep.subr.bf16.mxu0 0
        %821 = vmatpush1.bf16.msra.mxu0 0
        %822 = vmatprep.subr.bf16.mxu0 0
        %823 = vmatpush1.bf16.msra.mxu0 0
        %824 = vmatprep.subr.bf16.mxu0 0
        %825 = vmatpush1.bf16.msra.mxu0 0
        %826 = vmatprep.subr.bf16.mxu0 0
        %827 = vmatpush1.bf16.msra.mxu0 0
        %828 = vmatprep.subr.bf16.mxu0 0
        %829 = vmatpush1.bf16.msra.mxu0 0
        %830 = vmatprep.subr.bf16.mxu0 0
        %831 = vmatpush1.bf16.msra.mxu0 0
        %832 = vmatprep.subr.bf16.mxu0 0
        %833 = vmatpush1.bf16.msra.mxu0 0
        %834 = vmatprep.subr.bf16.mxu0 0
        %835 = vmatpush1.bf16.msra.mxu0 0
        %836 = vmatprep.subr.bf16.mxu0 0
        %837 = vmatpush1.bf16.msra.mxu0 0
        %838 = vmatprep.subr.bf16.mxu0 0
        %839 = vmatpush1.bf16.msra.mxu0 0
        %840 = vmatprep.subr.bf16.mxu0 0
        %841 = vmatpush1.bf16.msra.mxu0 0
        %842 = vmatprep.subr.bf16.mxu0 0
        %843 = vmatpush1.bf16.msra.mxu0 0
        %844 = vmatprep.subr.bf16.mxu0 0
        %845 = vmatpush1.bf16.msra.mxu0 0
        %846 = vmatprep.subr.bf16.mxu0 0
        %847 = vmatpush1.bf16.msra.mxu0 0
        %848 = vmatprep.subr.bf16.mxu0 0
        %849 = vmatpush1.bf16.msra.mxu0 0
        %850 = vmatprep.mubr.bf16.mxu0 0
        %851 = vmatmul.mubr.bf16.gmra.mrb[0].mxu0 %v813
        %v852 = vpop.f32.mrb[0].mxu0
        %v853 = vadd.f32 0.0, %v852
        %v854 = vpop.f32.mrb[0].mxu0
        %v855 = vadd.f32 0.0, %v854
        %v856 = vpop.f32.mrb[0].mxu0
        %v857 = vadd.f32 0.0, %v856
        %v858 = vpop.f32.mrb[0].mxu0
        %v859 = vadd.f32 0.0, %v858
        %860 = vmatprep.mubr.bf16.mxu0 0
        %861 = vmatmul.mubr.bf16.gmra.mrb[0].mxu0 %v816
        %v862 = vpop.f32.mrb[0].mxu0
        %v863 = vadd.f32 0.0, %v862
        %v864 = vpop.f32.mrb[0].mxu0
        %v865 = vadd.f32 0.0, %v864
        %v866 = vpop.f32.mrb[0].mxu0
        %v867 = vadd.f32 0.0, %v866
        %v868 = vpop.f32.mrb[0].mxu0
        %v869 = vadd.f32 0.0, %v868
        %870 = vdwg.mxu0
        %871 = vmatprep.subr.bf16.mxu0 %v487
        %872 = vmatpush1.bf16.msra.mxu0 %v484
        %873 = vmatprep.subr.bf16.mxu0 0
        %874 = vmatpush1.bf16.msra.mxu0 0
        %875 = vmatprep.subr.bf16.mxu0 0
        %876 = vmatpush1.bf16.msra.mxu0 0
        %877 = vmatprep.subr.bf16.mxu0 0
        %878 = vmatpush1.bf16.msra.mxu0 0
        %879 = vmatprep.subr.bf16.mxu0 0
        %880 = vmatpush1.bf16.msra.mxu0 0
        %881 = vmatprep.subr.bf16.mxu0 0
        %882 = vmatpush1.bf16.msra.mxu0 0
        %883 = vmatprep.subr.bf16.mxu0 0
        %884 = vmatpush1.bf16.msra.mxu0 0
        %885 = vmatprep.subr.bf16.mxu0 0
        %886 = vmatpush1.bf16.msra.mxu0 0
        %887 = vmatprep.subr.bf16.mxu0 0
        %888 = vmatpush1.bf16.msra.mxu0 0
        %889 = vmatprep.subr.bf16.mxu0 0
        %890 = vmatpush1.bf16.msra.mxu0 0
        %891 = vmatprep.subr.bf16.mxu0 0
        %892 = vmatpush1.bf16.msra.mxu0 0
        %893 = vmatprep.subr.bf16.mxu0 0
        %894 = vmatpush1.bf16.msra.mxu0 0
        %895 = vmatprep.subr.bf16.mxu0 0
        %896 = vmatpush1.bf16.msra.mxu0 0
        %897 = vmatprep.subr.bf16.mxu0 0
        %898 = vmatpush1.bf16.msra.mxu0 0
        %899 = vmatprep.subr.bf16.mxu0 0
        %900 = vmatpush1.bf16.msra.mxu0 0
        %901 = vmatprep.subr.bf16.mxu0 0
        %902 = vmatpush1.bf16.msra.mxu0 0
        %903 = vmatprep.mubr.bf16.mxu0 0
        %904 = vmatmul.mubr.bf16.gmra.mrb[0].mxu0 %v813
        %v905 = vpop.f32.mrb[0].mxu0
        %v906 = vadd.f32 0.0, %v905
        %v907 = vpop.f32.mrb[0].mxu0
        %v908 = vadd.f32 0.0, %v907
        %v909 = vpop.f32.mrb[0].mxu0
        %v910 = vadd.f32 0.0, %v909
        %v911 = vpop.f32.mrb[0].mxu0
        %v912 = vadd.f32 0.0, %v911
        %913 = vmatprep.mubr.bf16.mxu0 0
        %914 = vmatmul.mubr.bf16.gmra.mrb[0].mxu0 %v816
        %v915 = vpop.f32.mrb[0].mxu0
        %v916 = vadd.f32 0.0, %v915
        %v917 = vpop.f32.mrb[0].mxu0
        %v918 = vadd.f32 0.0, %v917
        %v919 = vpop.f32.mrb[0].mxu0
        %v920 = vadd.f32 0.0, %v919
        %v921 = vpop.f32.mrb[0].mxu0
        %v922 = vadd.f32 0.0, %v921
        %923 = vdwg.mxu0
        %v928 = vunpack.c.l.b16 %v786
        %v929 = vunpack.c.l.b16 %v787
        %v930 = vunpack.c.l.b16 %v788
        %v931 = vunpack.c.l.b16 %v789
        %v932 = vpack.c.b16 %v929, %v928
        %v933 = vpack.c.b16 %v931, %v930
        %v935 = vsel %vm657, %v932, 0
        %v938 = vsel %vm657, %v933, 0
        %940 = vmatprep.subr.bf16.mxu0 %v791
        %941 = vmatpush1.bf16.msra.mxu0 %v790
        %942 = vmatprep.subr.bf16.mxu0 %v795
        %943 = vmatpush1.bf16.msra.mxu0 %v794
        %944 = vmatprep.subr.bf16.mxu0 0
        %945 = vmatpush1.bf16.msra.mxu0 0
        %946 = vmatprep.subr.bf16.mxu0 0
        %947 = vmatpush1.bf16.msra.mxu0 0
        %948 = vmatprep.subr.bf16.mxu0 0
        %949 = vmatpush1.bf16.msra.mxu0 0
        %950 = vmatprep.subr.bf16.mxu0 0
        %951 = vmatpush1.bf16.msra.mxu0 0
        %952 = vmatprep.subr.bf16.mxu0 0
        %953 = vmatpush1.bf16.msra.mxu0 0
        %954 = vmatprep.subr.bf16.mxu0 0
        %955 = vmatpush1.bf16.msra.mxu0 0
        %956 = vmatprep.subr.bf16.mxu0 0
        %957 = vmatpush1.bf16.msra.mxu0 0
        %958 = vmatprep.subr.bf16.mxu0 0
        %959 = vmatpush1.bf16.msra.mxu0 0
        %960 = vmatprep.subr.bf16.mxu0 0
        %961 = vmatpush1.bf16.msra.mxu0 0
        %962 = vmatprep.subr.bf16.mxu0 0
        %963 = vmatpush1.bf16.msra.mxu0 0
        %964 = vmatprep.subr.bf16.mxu0 0
        %965 = vmatpush1.bf16.msra.mxu0 0
        %966 = vmatprep.subr.bf16.mxu0 0
        %967 = vmatpush1.bf16.msra.mxu0 0
        %968 = vmatprep.subr.bf16.mxu0 0
        %969 = vmatpush1.bf16.msra.mxu0 0
        %970 = vmatprep.subr.bf16.mxu0 0
        %971 = vmatpush1.bf16.msra.mxu0 0
        %972 = vmatprep.mubr.bf16.mxu0 0
        %973 = vmatmul.mubr.bf16.gmra.mrb[0].mxu0 %v935
        %v974 = vpop.f32.mrb[0].mxu0
        %v975 = vadd.f32 %v853, %v974
        %v976 = vpop.f32.mrb[0].mxu0
        %v977 = vadd.f32 %v855, %v976
        %v978 = vpop.f32.mrb[0].mxu0
        %v979 = vadd.f32 %v857, %v978
        %v980 = vpop.f32.mrb[0].mxu0
        %v981 = vadd.f32 %v859, %v980
        %982 = vmatprep.mubr.bf16.mxu0 0
        %983 = vmatmul.mubr.bf16.gmra.mrb[0].mxu0 %v938
        %v984 = vpop.f32.mrb[0].mxu0
        %v985 = vadd.f32 %v863, %v984
        %v986 = vpop.f32.mrb[0].mxu0
        %v987 = vadd.f32 %v865, %v986
        %v988 = vpop.f32.mrb[0].mxu0
        %v989 = vadd.f32 %v867, %v988
        %v990 = vpop.f32.mrb[0].mxu0
        %v991 = vadd.f32 %v869, %v990
        %992 = vdwg.mxu0
        %993 = vmatprep.subr.bf16.mxu0 %v793
        %994 = vmatpush1.bf16.msra.mxu0 %v792
        %995 = vmatprep.subr.bf16.mxu0 %v797
        %996 = vmatpush1.bf16.msra.mxu0 %v796
        %997 = vmatprep.subr.bf16.mxu0 0
        %998 = vmatpush1.bf16.msra.mxu0 0
        %999 = vmatprep.subr.bf16.mxu0 0
        %1000 = vmatpush1.bf16.msra.mxu0 0
        %1001 = vmatprep.subr.bf16.mxu0 0
        %1002 = vmatpush1.bf16.msra.mxu0 0
        %1003 = vmatprep.subr.bf16.mxu0 0
        %1004 = vmatpush1.bf16.msra.mxu0 0
        %1005 = vmatprep.subr.bf16.mxu0 0
        %1006 = vmatpush1.bf16.msra.mxu0 0
        %1007 = vmatprep.subr.bf16.mxu0 0
        %1008 = vmatpush1.bf16.msra.mxu0 0
        %1009 = vmatprep.subr.bf16.mxu0 0
        %1010 = vmatpush1.bf16.msra.mxu0 0
        %1011 = vmatprep.subr.bf16.mxu0 0
        %1012 = vmatpush1.bf16.msra.mxu0 0
        %1013 = vmatprep.subr.bf16.mxu0 0
        %1014 = vmatpush1.bf16.msra.mxu0 0
        %1015 = vmatprep.subr.bf16.mxu0 0
        %1016 = vmatpush1.bf16.msra.mxu0 0
        %1017 = vmatprep.subr.bf16.mxu0 0
        %1018 = vmatpush1.bf16.msra.mxu0 0
        %1019 = vmatprep.subr.bf16.mxu0 0
        %1020 = vmatpush1.bf16.msra.mxu0 0
        %1021 = vmatprep.subr.bf16.mxu0 0
        %1022 = vmatpush1.bf16.msra.mxu0 0
        %1023 = vmatprep.subr.bf16.mxu0 0
        %1024 = vmatpush1.bf16.msra.mxu0 0
        %1025 = vmatprep.mubr.bf16.mxu0 0
        %1026 = vmatmul.mubr.bf16.gmra.mrb[0].mxu0 %v935
        %v1027 = vpop.f32.mrb[0].mxu0
        %v1028 = vadd.f32 %v906, %v1027
        %v1029 = vpop.f32.mrb[0].mxu0
        %v1030 = vadd.f32 %v908, %v1029
        %v1031 = vpop.f32.mrb[0].mxu0
        %v1032 = vadd.f32 %v910, %v1031
        %v1033 = vpop.f32.mrb[0].mxu0
        %v1034 = vadd.f32 %v912, %v1033
        %1035 = vmatprep.mubr.bf16.mxu0 0
        %1036 = vmatmul.mubr.bf16.gmra.mrb[0].mxu0 %v938
        %v1037 = vpop.f32.mrb[0].mxu0
        %v1038 = vadd.f32 %v916, %v1037
        %v1039 = vpop.f32.mrb[0].mxu0
        %v1040 = vadd.f32 %v918, %v1039
        %v1041 = vpop.f32.mrb[0].mxu0
        %v1042 = vadd.f32 %v920, %v1041
        %v1043 = vpop.f32.mrb[0].mxu0
        %v1044 = vadd.f32 %v922, %v1043
        %1045 = vdwg.mxu0
        %v1046 = vld [vmem:[%s7] sm:$0xff]
        %v1047 = vld [vmem:[%s7 + $0x8] sm:$0xff]
        %v1048 = vld [vmem:[%s7 + $0x10] sm:$0xff]
        %v1049 = vld [vmem:[%s7 + $0x18] sm:$0xff]
        %1051 = vset.pattern.permute.xlu0 0
        %1052 = vperm.xlu0 %1051, %v1046
        %v1053 = vpop.permute.xlu0 %1052
        %1056 = vset.pattern.permute.xlu0 0
        %1057 = vperm.xlu0 %1056, %v1047
        %v1058 = vpop.permute.xlu0 %1057
        %1061 = vset.pattern.permute.xlu0 0
        %1062 = vperm.xlu0 %1061, %v1048
        %v1063 = vpop.permute.xlu0 %1062
        %1066 = vset.pattern.permute.xlu0 0
        %1067 = vperm.xlu0 %1066, %v1049
        %v1068 = vpop.permute.xlu0 %1067
        %v1070 = vadd.f32 %v975, %v1053
        %v1071 = vadd.f32 %v977, %v1053
        %v1072 = vadd.f32 %v1028, %v1053
        %v1073 = vadd.f32 %v1030, %v1053
        %v1074 = vadd.f32 %v979, %v1058
        %v1075 = vadd.f32 %v981, %v1058
        %v1076 = vadd.f32 %v1032, %v1058
        %v1077 = vadd.f32 %v1034, %v1058
        %v1078 = vadd.f32 %v985, %v1063
        %v1079 = vadd.f32 %v987, %v1063
        %v1080 = vadd.f32 %v1038, %v1063
        %v1081 = vadd.f32 %v1040, %v1063
        %v1082 = vadd.f32 %v989, %v1068
        %v1083 = vadd.f32 %v991, %v1068
        %v1084 = vadd.f32 %v1042, %v1068
        %v1085 = vadd.f32 %v1044, %v1068
        %v1086 = vmax.f32 %v1070, 0.0
        %v1087 = vmax.f32 %v1071, 0.0
        %v1088 = vmax.f32 %v1072, 0.0
        %v1089 = vmax.f32 %v1073, 0.0
        %v1090 = vmax.f32 %v1074, 0.0
        %v1091 = vmax.f32 %v1075, 0.0
        %v1092 = vmax.f32 %v1076, 0.0
        %v1093 = vmax.f32 %v1077, 0.0
        %v1094 = vmax.f32 %v1078, 0.0
        %v1095 = vmax.f32 %v1079, 0.0
        %v1096 = vmax.f32 %v1080, 0.0
        %v1097 = vmax.f32 %v1081, 0.0
        %v1098 = vmax.f32 %v1082, 0.0
        %v1099 = vmax.f32 %v1083, 0.0
        %v1100 = vmax.f32 %v1084, 0.0
        %v1101 = vmax.f32 %v1085, 0.0
        %v1102 = vpack.c.bf16 %v1090, %v1086
        %v1103 = vpack.c.bf16 %v1091, %v1087
        %v1104 = vpack.c.bf16 %v1092, %v1088
        %v1105 = vpack.c.bf16 %v1093, %v1089
        %v1106 = vpack.c.bf16 %v1098, %v1094
        %v1107 = vpack.c.bf16 %v1099, %v1095
        %v1108 = vpack.c.bf16 %v1100, %v1096
        %v1109 = vpack.c.bf16 %v1101, %v1097
        %v1110 = vld [vmem:[%s8] sm:$0xf]
        %v1111 = vld [vmem:[%s8 + $0x4] sm:$0xf]
        %v1112 = vld [vmem:[%s8 + $0x8] sm:$0xf]
        %v1113 = vld [vmem:[%s8 + $0xc] sm:$0xf]
        %v1114 = vld [vmem:[%s9] sm:$0xff]
        %v1115 = vld [vmem:[%s9 + $0x8] sm:$0xff]
        %v1116 = vld [vmem:[%s9 + $0x10] sm:$0xff]
        %v1117 = vld [vmem:[%s9 + $0x18] sm:$0xff]
        %1119 = vset.pattern.permute.xlu0 0
        %1120 = vperm.xlu0 %1119, %v1114
        %v1121 = vpop.permute.xlu0 %1120
        %1124 = vset.pattern.permute.xlu0 0
        %1125 = vperm.xlu0 %1124, %v1115
        %v1126 = vpop.permute.xlu0 %1125
        %1129 = vset.pattern.permute.xlu0 0
        %1130 = vperm.xlu0 %1129, %v1116
        %v1131 = vpop.permute.xlu0 %1130
        %1134 = vset.pattern.permute.xlu0 0
        %1135 = vperm.xlu0 %1134, %v1117
        %v1136 = vpop.permute.xlu0 %1135
        %v1142 = vunpack.c.l.b16 %v1110
        %v1143 = vunpack.c.l.b16 %v1111
        %v1144 = vunpack.c.l.b16 %v1112
        %v1145 = vunpack.c.l.b16 %v1113
        %v1146 = vpack.c.b16 %v1143, %v1142
        %v1147 = vpack.c.b16 %v1145, %v1144
        %v1149 = vsel %vm657, %v1146, 0
        %v1152 = vsel %vm657, %v1147, 0
        %1154 = vmatprep.subr.bf16.mxu0 %v1103
        %1155 = vmatpush1.bf16.msra.mxu0 %v1102
        %1156 = vmatprep.subr.bf16.mxu0 %v1107
        %1157 = vmatpush1.bf16.msra.mxu0 %v1106
        %1158 = vmatprep.subr.bf16.mxu0 0
        %1159 = vmatpush1.bf16.msra.mxu0 0
        %1160 = vmatprep.subr.bf16.mxu0 0
        %1161 = vmatpush1.bf16.msra.mxu0 0
        %1162 = vmatprep.subr.bf16.mxu0 0
        %1163 = vmatpush1.bf16.msra.mxu0 0
        %1164 = vmatprep.subr.bf16.mxu0 0
        %1165 = vmatpush1.bf16.msra.mxu0 0
        %1166 = vmatprep.subr.bf16.mxu0 0
        %1167 = vmatpush1.bf16.msra.mxu0 0
        %1168 = vmatprep.subr.bf16.mxu0 0
        %1169 = vmatpush1.bf16.msra.mxu0 0
        %1170 = vmatprep.subr.bf16.mxu0 0
        %1171 = vmatpush1.bf16.msra.mxu0 0
        %1172 = vmatprep.subr.bf16.mxu0 0
        %1173 = vmatpush1.bf16.msra.mxu0 0
        %1174 = vmatprep.subr.bf16.mxu0 0
        %1175 = vmatpush1.bf16.msra.mxu0 0
        %1176 = vmatprep.subr.bf16.mxu0 0
        %1177 = vmatpush1.bf16.msra.mxu0 0
        %1178 = vmatprep.subr.bf16.mxu0 0
        %1179 = vmatpush1.bf16.msra.mxu0 0
        %1180 = vmatprep.subr.bf16.mxu0 0
        %1181 = vmatpush1.bf16.msra.mxu0 0
        %1182 = vmatprep.subr.bf16.mxu0 0
        %1183 = vmatpush1.bf16.msra.mxu0 0
        %1184 = vmatprep.subr.bf16.mxu0 0
        %1185 = vmatpush1.bf16.msra.mxu0 0
        %1186 = vmatprep.mubr.bf16.mxu0 0
        %1187 = vmatmul.mubr.bf16.gmra.mrb[0].mxu0 %v1149
        %v1188 = vpop.f32.mrb[0].mxu0
        %v1189 = vadd.f32 %v1121, %v1188
        %v1190 = vpop.f32.mrb[0].mxu0
        %v1191 = vadd.f32 %v1121, %v1190
        %v1192 = vpop.f32.mrb[0].mxu0
        %v1193 = vadd.f32 %v1126, %v1192
        %v1194 = vpop.f32.mrb[0].mxu0
        %v1195 = vadd.f32 %v1126, %v1194
        %1196 = vmatprep.mubr.bf16.mxu0 0
        %1197 = vmatmul.mubr.bf16.gmra.mrb[0].mxu0 %v1152
        %v1198 = vpop.f32.mrb[0].mxu0
        %v1199 = vadd.f32 %v1131, %v1198
        %v1200 = vpop.f32.mrb[0].mxu0
        %v1201 = vadd.f32 %v1131, %v1200
        %v1202 = vpop.f32.mrb[0].mxu0
        %v1203 = vadd.f32 %v1136, %v1202
        %v1204 = vpop.f32.mrb[0].mxu0
        %v1205 = vadd.f32 %v1136, %v1204
        %1206 = vdwg.mxu0
        %1207 = vmatprep.subr.bf16.mxu0 %v1105
        %1208 = vmatpush1.bf16.msra.mxu0 %v1104
        %1209 = vmatprep.subr.bf16.mxu0 %v1109
        %1210 = vmatpush1.bf16.msra.mxu0 %v1108
        %1211 = vmatprep.subr.bf16.mxu0 0
        %1212 = vmatpush1.bf16.msra.mxu0 0
        %1213 = vmatprep.subr.bf16.mxu0 0
        %1214 = vmatpush1.bf16.msra.mxu0 0
        %1215 = vmatprep.subr.bf16.mxu0 0
        %1216 = vmatpush1.bf16.msra.mxu0 0
        %1217 = vmatprep.subr.bf16.mxu0 0
        %1218 = vmatpush1.bf16.msra.mxu0 0
        %1219 = vmatprep.subr.bf16.mxu0 0
        %1220 = vmatpush1.bf16.msra.mxu0 0
        %1221 = vmatprep.subr.bf16.mxu0 0
        %1222 = vmatpush1.bf16.msra.mxu0 0
        %1223 = vmatprep.subr.bf16.mxu0 0
        %1224 = vmatpush1.bf16.msra.mxu0 0
        %1225 = vmatprep.subr.bf16.mxu0 0
        %1226 = vmatpush1.bf16.msra.mxu0 0
        %1227 = vmatprep.subr.bf16.mxu0 0
        %1228 = vmatpush1.bf16.msra.mxu0 0
        %1229 = vmatprep.subr.bf16.mxu0 0
        %1230 = vmatpush1.bf16.msra.mxu0 0
        %1231 = vmatprep.subr.bf16.mxu0 0
        %1232 = vmatpush1.bf16.msra.mxu0 0
        %1233 = vmatprep.subr.bf16.mxu0 0
        %1234 = vmatpush1.bf16.msra.mxu0 0
        %1235 = vmatprep.subr.bf16.mxu0 0
        %1236 = vmatpush1.bf16.msra.mxu0 0
        %1237 = vmatprep.subr.bf16.mxu0 0
        %1238 = vmatpush1.bf16.msra.mxu0 0
        %1239 = vmatprep.mubr.bf16.mxu0 0
        %1240 = vmatmul.mubr.bf16.gmra.mrb[0].mxu0 %v1149
        %v1241 = vpop.f32.mrb[0].mxu0
        %v1242 = vadd.f32 %v1121, %v1241
        %v1243 = vpop.f32.mrb[0].mxu0
        %v1244 = vadd.f32 %v1121, %v1243
        %v1245 = vpop.f32.mrb[0].mxu0
        %v1246 = vadd.f32 %v1126, %v1245
        %v1247 = vpop.f32.mrb[0].mxu0
        %v1248 = vadd.f32 %v1126, %v1247
        %1249 = vmatprep.mubr.bf16.mxu0 0
        %1250 = vmatmul.mubr.bf16.gmra.mrb[0].mxu0 %v1152
        %v1251 = vpop.f32.mrb[0].mxu0
        %v1252 = vadd.f32 %v1131, %v1251
        %v1253 = vpop.f32.mrb[0].mxu0
        %v1254 = vadd.f32 %v1131, %v1253
        %v1255 = vpop.f32.mrb[0].mxu0
        %v1256 = vadd.f32 %v1136, %v1255
        %v1257 = vpop.f32.mrb[0].mxu0
        %v1258 = vadd.f32 %v1136, %v1257
        %1259 = vdwg.mxu0
        %v1260 = vmax.f32 %v1189, 0.0
        %v1261 = vmax.f32 %v1191, 0.0
        %v1262 = vmax.f32 %v1242, 0.0
        %v1263 = vmax.f32 %v1244, 0.0
        %v1264 = vmax.f32 %v1193, 0.0
        %v1265 = vmax.f32 %v1195, 0.0
        %v1266 = vmax.f32 %v1246, 0.0
        %v1267 = vmax.f32 %v1248, 0.0
        %v1268 = vmax.f32 %v1199, 0.0
        %v1269 = vmax.f32 %v1201, 0.0
        %v1270 = vmax.f32 %v1252, 0.0
        %v1271 = vmax.f32 %v1254, 0.0
        %v1272 = vmax.f32 %v1203, 0.0
        %v1273 = vmax.f32 %v1205, 0.0
        %v1274 = vmax.f32 %v1256, 0.0
        %v1275 = vmax.f32 %v1258, 0.0
        %v1276 = vpack.c.bf16 %v1264, %v1260
        %v1277 = vpack.c.bf16 %v1265, %v1261
        %v1278 = vpack.c.bf16 %v1266, %v1262
        %v1279 = vpack.c.bf16 %v1267, %v1263
        %v1280 = vpack.c.bf16 %v1272, %v1268
        %v1281 = vpack.c.bf16 %v1273, %v1269
        %v1282 = vpack.c.bf16 %v1274, %v1270
        %v1283 = vpack.c.bf16 %v1275, %v1271
        %v1284 = vld [vmem:[%s10] sm:$0xf]
        %v1285 = vld [vmem:[%s11] sm:$0xff]
        %1287 = vset.pattern.permute.xlu0 0
        %1288 = vperm.xlu0 %1287, %v1285
        %v1289 = vpop.permute.xlu0 %1288
        %v1292 = vsel %vm657, %v1284, 0
        %1294 = vmatprep.subr.bf16.mxu0 %v1277
        %1295 = vmatpush1.bf16.msra.mxu0 %v1276
        %1296 = vmatprep.subr.bf16.mxu0 %v1281
        %1297 = vmatpush1.bf16.msra.mxu0 %v1280
        %1298 = vmatprep.subr.bf16.mxu0 0
        %1299 = vmatpush1.bf16.msra.mxu0 0
        %1300 = vmatprep.subr.bf16.mxu0 0
        %1301 = vmatpush1.bf16.msra.mxu0 0
        %1302 = vmatprep.subr.bf16.mxu0 0
        %1303 = vmatpush1.bf16.msra.mxu0 0
        %1304 = vmatprep.subr.bf16.mxu0 0
        %1305 = vmatpush1.bf16.msra.mxu0 0
        %1306 = vmatprep.subr.bf16.mxu0 0
        %1307 = vmatpush1.bf16.msra.mxu0 0
        %1308 = vmatprep.subr.bf16.mxu0 0
        %1309 = vmatpush1.bf16.msra.mxu0 0
        %1310 = vmatprep.subr.bf16.mxu0 0
        %1311 = vmatpush1.bf16.msra.mxu0 0
        %1312 = vmatprep.subr.bf16.mxu0 0
        %1313 = vmatpush1.bf16.msra.mxu0 0
        %1314 = vmatprep.subr.bf16.mxu0 0
        %1315 = vmatpush1.bf16.msra.mxu0 0
        %1316 = vmatprep.subr.bf16.mxu0 0
        %1317 = vmatpush1.bf16.msra.mxu0 0
        %1318 = vmatprep.subr.bf16.mxu0 0
        %1319 = vmatpush1.bf16.msra.mxu0 0
        %1320 = vmatprep.subr.bf16.mxu0 0
        %1321 = vmatpush1.bf16.msra.mxu0 0
        %1322 = vmatprep.subr.bf16.mxu0 0
        %1323 = vmatpush1.bf16.msra.mxu0 0
        %1324 = vmatprep.subr.bf16.mxu0 0
        %1325 = vmatpush1.bf16.msra.mxu0 0
        %1326 = vmatprep.mubr.bf16.mxu0 0
        %1327 = vmatmul.mubr.bf16.gmra.mrb[0].mxu0 %v1292
        %v1328 = vpop.f32.mrb[0].mxu0
        %v1329 = vadd.f32 %v1289, %v1328
        %v1330 = vpop.f32.mrb[0].mxu0
        %v1331 = vadd.f32 %v1289, %v1330
        %v1332 = vpop.f32.mrb[0].mxu0
        %v1333 = vpop.f32.mrb[0].mxu0
        %1334 = vdwg.mxu0
        %1335 = vmatprep.subr.bf16.mxu0 %v1279
        %1336 = vmatpush1.bf16.msra.mxu0 %v1278
        %1337 = vmatprep.subr.bf16.mxu0 %v1283
        %1338 = vmatpush1.bf16.msra.mxu0 %v1282
        %1339 = vmatprep.subr.bf16.mxu0 0
        %1340 = vmatpush1.bf16.msra.mxu0 0
        %1341 = vmatprep.subr.bf16.mxu0 0
        %1342 = vmatpush1.bf16.msra.mxu0 0
        %1343 = vmatprep.subr.bf16.mxu0 0
        %1344 = vmatpush1.bf16.msra.mxu0 0
        %1345 = vmatprep.subr.bf16.mxu0 0
        %1346 = vmatpush1.bf16.msra.mxu0 0
        %1347 = vmatprep.subr.bf16.mxu0 0
        %1348 = vmatpush1.bf16.msra.mxu0 0
        %1349 = vmatprep.subr.bf16.mxu0 0
        %1350 = vmatpush1.bf16.msra.mxu0 0
        %1351 = vmatprep.subr.bf16.mxu0 0
        %1352 = vmatpush1.bf16.msra.mxu0 0
        %1353 = vmatprep.subr.bf16.mxu0 0
        %1354 = vmatpush1.bf16.msra.mxu0 0
        %1355 = vmatprep.subr.bf16.mxu0 0
        %1356 = vmatpush1.bf16.msra.mxu0 0
        %1357 = vmatprep.subr.bf16.mxu0 0
        %1358 = vmatpush1.bf16.msra.mxu0 0
        %1359 = vmatprep.subr.bf16.mxu0 0
        %1360 = vmatpush1.bf16.msra.mxu0 0
        %1361 = vmatprep.subr.bf16.mxu0 0
        %1362 = vmatpush1.bf16.msra.mxu0 0
        %1363 = vmatprep.subr.bf16.mxu0 0
        %1364 = vmatpush1.bf16.msra.mxu0 0
        %1365 = vmatprep.subr.bf16.mxu0 0
        %1366 = vmatpush1.bf16.msra.mxu0 0
        %1367 = vmatprep.mubr.bf16.mxu0 0
        %1368 = vmatmul.mubr.bf16.gmra.mrb[0].mxu0 %v1292
        %v1369 = vpop.f32.mrb[0].mxu0
        %v1370 = vadd.f32 %v1289, %v1369
        %v1371 = vpop.f32.mrb[0].mxu0
        %v1372 = vadd.f32 %v1289, %v1371
        %v1373 = vpop.f32.mrb[0].mxu0
        %v1374 = vpop.f32.mrb[0].mxu0
        %1375 = vdwg.mxu0
        %1376 = vst [vmem:[%s407] sm:$0xff] %v1329
        %1377 = vst [vmem:[%s407 + $0x8] sm:$0xff] %v1331
        %1378 = vst [vmem:[%s407 + $0x10] sm:$0xff] %v1370
        %1379 = vst [vmem:[%s407 + $0x18] sm:$0xff] %v1372
        %s1380 = sand.u32 %s291, 1
        %s1381 = scalar_lea.sflag [#allocation3], %s1380
        %s1382 = sand.u32 %s291, 1
        %s1383 = smul.addr %s1382, 32
        %s1384 = scalar_lea.vmem [#allocation2], %s1383
        // Predicated region
        $region69: #{tpu_custom_call.1} parent=67 // pred_check
          %p1385 = pneg %p301
        $region70: #{tpu_custom_call.1} parent=67 // pred_check_branch
          %1387 = sbr.rel (%p1385) target = $region72
        $region71: #{tpu_custom_call.1} parent=67 // pred_region
          %s1388 = smul.u32 4, %s26
          %s1390 = ssub.s32 512, 512
          %1391 = vsyncadd %s1381, %s1390
          %s1392 = smul.addr %s1388, 128
          %s1393 = scalar_lea.hbm %s12, %s1392
          %s1395 = sshll.u32 %s1384, 4
          %s1396 = int_to_ptr.vmem [resolvable:$true] %s1395
          %1398 = dma.vmem_to_hbm [thread:$0]  %s1396, 512, %s1393, %s1381
        $region72: #{tpu_custom_call.1} parent=67 // pred_fallthru
          _
      $region68: #{tpu_custom_call.1} parent=5 // pred_fallthru
        _
      %p1399 = scmp.le.s32.totalorder 2, %s21
      // Predicated region
      $region73: #{tpu_custom_call.1} parent=5 // pred_check
        %p1400 = pneg %p1399
      $region74: #{tpu_custom_call.1} parent=5 // pred_check_branch
        %1402 = sbr.rel (%p1400) target = $region76
      $region75: #{tpu_custom_call.1} parent=5 // pred_region
        %s1403 = ssub.s32 %s21, 2
        // Predicated region
        $region77: #{tpu_custom_call.1} parent=75 // pred_check
          %p1404 = pneg %p307
        $region78: #{tpu_custom_call.1} parent=75 // pred_check_branch
          %1406 = sbr.rel (%p1404) target = $region80
        $region79: #{tpu_custom_call.1} parent=75 // pred_region
          %s1407 = sand.u32 %s292, 1
          %s1408 = scalar_lea.sflag [#allocation3], %s1407
          %s1409 = sand.u32 %s292, 1
          %s1410 = smul.addr %s1409, 32
          %s1411 = scalar_lea.vmem [#allocation2], %s1410
          %1412 = dma.done %s1408, 512
        $region80: #{tpu_custom_call.1} parent=75 // pred_fallthru
          _
      $region76: #{tpu_custom_call.1} parent=5 // pred_fallthru
        _
    $region6: #{tpu_custom_call.1} parent=1 // loop_footer
      %s25 = sadd.s32 1, %s21
    $region7: #{tpu_custom_call.1} parent=1 // loop_footer_branch
      %20 = sbr.rel target = $region3
    $region8: #{tpu_custom_call.1} parent=1 // loop_exit
      _
    %1413 = vsyncpa [#allocation3], 1
    %s1414 = scalar_lea.sflag [#allocation3], 1
    %1415 = vsyncpa %s1414, 1

</llo_original>
